<compile_context>
chip_gen: v7x
topology: tpu7x:2x2x1
jax: 0.10.0
libtpu: 0.0.40
codegen_flags: <defaults>
</compile_context>

<pallas_src>
import jax
import jax.numpy as jnp
import numpy as np
from jax.experimental import pallas as pl
from jax.experimental.pallas import tpu as pltpu


def _pick_row_tile(h):
    # Largest convenient row tile that divides H (grid = (B, H // Th)).
    for th in (8, 4, 2, 1):
        if h % th == 0:
            return th
    return 1


# ---------------------------------------------------------------------------
# Kernel 1: fused nearest-2x upsample + pad-1 + 3x3 conv + bias (NHWC inside).
#   xm_ref  : (1, Th, W+2, Cin)   body rows of the zero-padded input tile
#   xh1_ref : (1, 1,  W+2, Cin)   halo row (i+1)*Th
#   xh2_ref : (1, 1,  W+2, Cin)   halo row (i+1)*Th + 1
#   wk_ref  : (2, 6*Cin, 2*Cout)  folded weights, index 0 = output-row parity a
#   b_ref   : (1, 2*Cout)         bias duplicated over the width parity b
#   o_ref   : (1, 2*Th, W, 2*Cout)  == output rows [2*i*Th, 2*(i+1)*Th) in NHWC
#   patch_ref: VMEM scratch (Th*W, 6*Cin) bf16 (im2col patch)
# ---------------------------------------------------------------------------
def _fused_up_conv_kernel(xm_ref, xh1_ref, xh2_ref, wk_ref, b_ref, o_ref,
                          patch_ref):
    th = xm_ref.shape[1]
    wp = xm_ref.shape[2]
    w = wp - 2

    bias = b_ref[...]                                   # (1, 2*Cout), hoisted

    # Load the Th+2 padded input rows (body + 2 halo rows) once.
    rows = [xm_ref[0, p] for p in range(th)] + [xh1_ref[0, 0], xh2_ref[0, 0]]

    for a in range(2):                                  # output-row parity
        # Build the im2col patch: M ordered (r, wi), K ordered (t, s, ci).
        for r in range(th):
            pieces = []
            for t in range(2):                          # input-row tap
                row = rows[r + a + t]                   # (W+2, Cin)
                for s in range(3):                      # input-col tap
                    pieces.append(row[s:s + w, :])      # (W, Cin)
            patch_ref[r * w:(r + 1) * w, :] = jnp.concatenate(pieces, axis=-1)

        # One big MXU matmul per parity: (Th*W, 6*Cin) @ (6*Cin, 2*Cout).
        res = jnp.dot(patch_ref[...], wk_ref[a],
                      preferred_element_type=jnp.float32)
        res = res + bias                                # bias added once per slab

        # res rows (r, wi) with channels (b, co) are exactly NHWC memory order
        # of output row 2*(i*Th + r) + a.
        for r in range(th):
            o_ref[0, 2 * r + a] = res[r * w:(r + 1) * w, :].astype(o_ref.dtype)


def _fold_weights(w_oihw):
    """Fold the nearest-2x duplication into the 3x3 conv weights.

    Returns (2, 6*Cin, 2*Cout): leading index = output-row parity a;
    K ordered (t, s, ci); N ordered (b, co) with b = output-col parity.
    """
    w = jnp.transpose(w_oihw, (2, 3, 1, 0)).astype(jnp.float32)   # (3,3,Cin,Cout)
    cin, cout = w.shape[2], w.shape[3]
    zeros = jnp.zeros((cin, cout), jnp.float32)
    # Vertical fold: a=0 -> input rows {hi-1, hi} with {w[0], w[1]+w[2]}
    #                a=1 -> input rows {hi, hi+1} with {w[0]+w[1], w[2]}
    vert = [[w[0], w[1] + w[2]], [w[0] + w[1], w[2]]]
    mats = []
    for a in range(2):
        blocks = []
        for t in range(2):
            at = vert[a][t]                             # (3, Cin, Cout) over dw
            blocks += [
                jnp.concatenate([at[0], zeros], axis=-1),                 # col wi-1 (b=0 only)
                jnp.concatenate([at[1] + at[2], at[0] + at[1]], axis=-1), # col wi
                jnp.concatenate([zeros, at[2]], axis=-1),                 # col wi+1 (b=1 only)
            ]
        mats.append(jnp.concatenate(blocks, axis=0))    # (6*Cin, 2*Cout)
    return jnp.stack(mats, axis=0)                      # (2, 6*Cin, 2*Cout)


def fused_upsample_conv(x_nhwc, w_oihw, bias):
    B, H, W, Cin = x_nhwc.shape
    Cout = w_oihw.shape[0]
    th = _pick_row_tile(H)
    n_tiles = H // th
    Wp = W + 2

    # Layout glue on 1x-sized tensors only.
    xp = jnp.pad(x_nhwc, ((0, 0), (1, 1), (1, 1), (0, 0))).astype(jnp.bfloat16)
    wk = _fold_weights(w_oihw).astype(jnp.bfloat16)
    bias2 = jnp.concatenate([bias, bias]).reshape(1, 2 * Cout).astype(jnp.float32)

    out = pl.pallas_call(
        _fused_up_conv_kernel,
        out_shape=jax.ShapeDtypeStruct((B, 2 * H, W, 2 * Cout), jnp.float32),
        grid=(B, n_tiles),
        in_specs=[
            pl.BlockSpec((1, th, Wp, Cin), lambda b, i: (b, i, 0, 0)),
            pl.BlockSpec((1, 1, Wp, Cin), lambda b, i: (b, (i + 1) * th, 0, 0)),
            pl.BlockSpec((1, 1, Wp, Cin), lambda b, i: (b, (i + 1) * th + 1, 0, 0)),
            pl.BlockSpec((2, 6 * Cin, 2 * Cout), lambda b, i: (0, 0, 0)),
            pl.BlockSpec((1, 2 * Cout), lambda b, i: (0, 0)),
        ],
        out_specs=pl.BlockSpec((1, 2 * th, W, 2 * Cout), lambda b, i: (b, i, 0, 0)),
        scratch_shapes=[pltpu.VMEM((th * W, 6 * Cin), jnp.bfloat16)],
        compiler_params=pltpu.CompilerParams(
            dimension_semantics=("parallel", "parallel")),
    )(xp, xp, xp, wk, bias2)

    # (B, 2H, W, 2*Cout) has identical linear order to NHWC (B, 2H, 2W, Cout).
    return out.reshape(B, 2 * H, 2 * W, Cout)


# ---------------------------------------------------------------------------
# Kernel 2: nearest-2x upsample only (with_conv=False).
# Width duplication is a lane concat ((W, C) -> (W, 2C), same linear order as
# (2W, C)); height duplication is two row stores.  Final layout comes straight
# out of the kernel.
# ---------------------------------------------------------------------------
def _nearest2x_kernel(x_ref, o_ref):
    th = x_ref.shape[1]
    for r in range(th):
        row = x_ref[0, r]                               # (W, C)
        v = jnp.concatenate([row, row], axis=-1)        # (W, 2C)
        o_ref[0, 2 * r] = v
        o_ref[0, 2 * r + 1] = v


def nearest_upsample_2x(x_nhwc):
    B, H, W, C = x_nhwc.shape
    th = _pick_row_tile(H)
    out = pl.pallas_call(
        _nearest2x_kernel,
        out_shape=jax.ShapeDtypeStruct((B, 2 * H, W, 2 * C), x_nhwc.dtype),
        grid=(B, H // th),
        in_specs=[pl.BlockSpec((1, th, W, C), lambda b, i: (b, i, 0, 0))],
        out_specs=pl.BlockSpec((1, 2 * th, W, 2 * C), lambda b, i: (b, i, 0, 0)),
        compiler_params=pltpu.CompilerParams(
            dimension_semantics=("parallel", "parallel")),
    )(x_nhwc)
    return out.reshape(B, 2 * H, 2 * W, C)


# ---------------------------------------------------------------------------
# Full forward pass == PyTorch Upsample.forward (NCHW in / NCHW out).
# ---------------------------------------------------------------------------
def upsample_forward(x_nchw, params, with_conv):
    x = jnp.transpose(x_nchw, (0, 2, 3, 1)).astype(jnp.float32)   # NCHW -> NHWC (1x tensor)
    if with_conv:
        out = fused_upsample_conv(x, params["w"], params["b"])
    else:
        out = nearest_upsample_2x(x)
    return jnp.transpose(out, (0, 3, 1, 2))                       # NHWC -> NCHW boundary glue


# Pure-JAX reference for verification.
def reference_forward(x_nchw, params, with_conv):
    up = jnp.repeat(jnp.repeat(x_nchw, 2, axis=2), 2, axis=3)
    if not with_conv:
        return up
    out = jax.lax.conv_general_dilated(
        up, params["w"], window_strides=(1, 1), padding=((1, 1), (1, 1)),
        dimension_numbers=("NCHW", "OIHW", "NCHW"))
    return out + params["b"].reshape(1, -1, 1, 1)


if __name__ == "__main__":
    B, Cin, Cout, H, W = 2, 4, 8, 16, 16
    key = jax.random.PRNGKey(0)
    kx, kw, kb = jax.random.split(key, 3)
    x = jax.random.normal(kx, (B, Cin, H, W), dtype=jnp.float32)

    # Deterministic Conv2d(in=4, out=8, k=3, pad=1) parameters (PyTorch-style init).
    bound = 1.0 / np.sqrt(Cin * 3 * 3)
    params = {
        "w": jax.random.uniform(kw, (Cout, Cin, 3, 3), jnp.float32, -bound, bound),
        "b": jax.random.uniform(kb, (Cout,), jnp.float32, -bound, bound),
    }

    out_conv = jax.block_until_ready(upsample_forward(x, params, with_conv=True))
    out_noconv = jax.block_until_ready(upsample_forward(x, params, with_conv=False))

    ref_conv = reference_forward(x, params, True)
    ref_noconv = reference_forward(x, params, False)

    assert out_conv.shape == (B, Cout, 2 * H, 2 * W), out_conv.shape
    assert out_noconv.shape == (B, Cin, 2 * H, 2 * W), out_noconv.shape
    assert np.allclose(np.asarray(out_noconv), np.asarray(ref_noconv)), "upsample mismatch"
    # bf16 MXU operands with f32 accumulation -> compare at 2e-2.
    assert np.allclose(np.asarray(out_conv), np.asarray(ref_conv),
                       rtol=2e-2, atol=2e-2), "conv mismatch"
    print("KERNEL_OK")
</pallas_src>

<mosaic_0001>
module attributes {stable_mosaic.version = 11 : i64} {
  func.func @_fused_up_conv_kernel(%arg0: i32, %arg1: i32, %arg2: memref<1x8x18x4xbf16, #tpu.memory_space<vmem>>, %arg3: memref<1x1x18x4xbf16, #tpu.memory_space<vmem>>, %arg4: memref<1x1x18x4xbf16, #tpu.memory_space<vmem>>, %arg5: memref<2x24x16xbf16, #tpu.memory_space<vmem>>, %arg6: memref<1x16xf32, #tpu.memory_space<vmem>>, %arg7: memref<1x16x16x16xf32, #tpu.memory_space<vmem>>, %arg8: memref<128x24xbf16, #tpu.memory_space<vmem>>) attributes {dimension_semantics = [#tpu.dimension_semantics<parallel>, #tpu.dimension_semantics<parallel>], iteration_bounds = array<i64: 2, 2>, scalar_prefetch = 0 : i64, scratch_operands = 1 : i64, tpu.core_type = #tpu.core_type<tc>, window_params = [{transform_indices = @transform_0, window_bounds = array<i64: 1, 8, 18, 4>}, {transform_indices = @transform_1, window_bounds = array<i64: 1, 1, 18, 4>}, {transform_indices = @transform_2, window_bounds = array<i64: 1, 1, 18, 4>}, {pipeline_mode = #tpu.pipeline_mode<synchronous>, transform_indices = @transform_3, window_bounds = array<i64: 2, 24, 16>}, {pipeline_mode = #tpu.pipeline_mode<synchronous>, transform_indices = @transform_4, window_bounds = array<i64: 1, 16>}, {transform_indices = @transform_5, window_bounds = array<i64: 1, 16, 16, 16>}]} {
    %c0 = arith.constant 0 : index
    %c0_0 = arith.constant 0 : index
    %0 = vector.load %arg6[%c0, %c0_0] : memref<1x16xf32, #tpu.memory_space<vmem>>, vector<1x16xf32>
    %c0_1 = arith.constant 0 : index
    %c0_2 = arith.constant 0 : index
    %c0_3 = arith.constant 0 : index
    %c0_4 = arith.constant 0 : index
    %1 = vector.load %arg2[%c0_1, %c0_2, %c0_3, %c0_4] : memref<1x8x18x4xbf16, #tpu.memory_space<vmem>>, vector<1x1x18x4xbf16>
    %2 = vector.shape_cast %1 : vector<1x1x18x4xbf16> to vector<18x4xbf16>
    %c0_5 = arith.constant 0 : index
    %c1 = arith.constant 1 : index
    %c0_6 = arith.constant 0 : index
    %c0_7 = arith.constant 0 : index
    %3 = vector.load %arg2[%c0_5, %c1, %c0_6, %c0_7] : memref<1x8x18x4xbf16, #tpu.memory_space<vmem>>, vector<1x1x18x4xbf16>
    %4 = vector.shape_cast %3 : vector<1x1x18x4xbf16> to vector<18x4xbf16>
    %c0_8 = arith.constant 0 : index
    %c2 = arith.constant 2 : index
    %c0_9 = arith.constant 0 : index
    %c0_10 = arith.constant 0 : index
    %5 = vector.load %arg2[%c0_8, %c2, %c0_9, %c0_10] : memref<1x8x18x4xbf16, #tpu.memory_space<vmem>>, vector<1x1x18x4xbf16>
    %6 = vector.shape_cast %5 : vector<1x1x18x4xbf16> to vector<18x4xbf16>
    %c0_11 = arith.constant 0 : index
    %c3 = arith.constant 3 : index
    %c0_12 = arith.constant 0 : index
    %c0_13 = arith.constant 0 : index
    %7 = vector.load %arg2[%c0_11, %c3, %c0_12, %c0_13] : memref<1x8x18x4xbf16, #tpu.memory_space<vmem>>, vector<1x1x18x4xbf16>
    %8 = vector.shape_cast %7 : vector<1x1x18x4xbf16> to vector<18x4xbf16>
    %c0_14 = arith.constant 0 : index
    %c4 = arith.constant 4 : index
    %c0_15 = arith.constant 0 : index
    %c0_16 = arith.constant 0 : index
    %9 = vector.load %arg2[%c0_14, %c4, %c0_15, %c0_16] : memref<1x8x18x4xbf16, #tpu.memory_space<vmem>>, vector<1x1x18x4xbf16>
    %10 = vector.shape_cast %9 : vector<1x1x18x4xbf16> to vector<18x4xbf16>
    %c0_17 = arith.constant 0 : index
    %c5 = arith.constant 5 : index
    %c0_18 = arith.constant 0 : index
    %c0_19 = arith.constant 0 : index
    %11 = vector.load %arg2[%c0_17, %c5, %c0_18, %c0_19] : memref<1x8x18x4xbf16, #tpu.memory_space<vmem>>, vector<1x1x18x4xbf16>
    %12 = vector.shape_cast %11 : vector<1x1x18x4xbf16> to vector<18x4xbf16>
    %c0_20 = arith.constant 0 : index
    %c6 = arith.constant 6 : index
    %c0_21 = arith.constant 0 : index
    %c0_22 = arith.constant 0 : index
    %13 = vector.load %arg2[%c0_20, %c6, %c0_21, %c0_22] : memref<1x8x18x4xbf16, #tpu.memory_space<vmem>>, vector<1x1x18x4xbf16>
    %14 = vector.shape_cast %13 : vector<1x1x18x4xbf16> to vector<18x4xbf16>
    %c0_23 = arith.constant 0 : index
    %c7 = arith.constant 7 : index
    %c0_24 = arith.constant 0 : index
    %c0_25 = arith.constant 0 : index
    %15 = vector.load %arg2[%c0_23, %c7, %c0_24, %c0_25] : memref<1x8x18x4xbf16, #tpu.memory_space<vmem>>, vector<1x1x18x4xbf16>
    %16 = vector.shape_cast %15 : vector<1x1x18x4xbf16> to vector<18x4xbf16>
    %c0_26 = arith.constant 0 : index
    %c0_27 = arith.constant 0 : index
    %c0_28 = arith.constant 0 : index
    %c0_29 = arith.constant 0 : index
    %17 = vector.load %arg3[%c0_26, %c0_27, %c0_28, %c0_29] : memref<1x1x18x4xbf16, #tpu.memory_space<vmem>>, vector<1x1x18x4xbf16>
    %18 = vector.shape_cast %17 : vector<1x1x18x4xbf16> to vector<18x4xbf16>
    %c0_30 = arith.constant 0 : index
    %c0_31 = arith.constant 0 : index
    %c0_32 = arith.constant 0 : index
    %c0_33 = arith.constant 0 : index
    %19 = vector.load %arg4[%c0_30, %c0_31, %c0_32, %c0_33] : memref<1x1x18x4xbf16, #tpu.memory_space<vmem>>, vector<1x1x18x4xbf16>
    %20 = vector.shape_cast %19 : vector<1x1x18x4xbf16> to vector<18x4xbf16>
    %21 = vector.extract_strided_slice %2 {offsets = [0, 0], sizes = [16, 4], strides = [1, 1]} : vector<18x4xbf16> to vector<16x4xbf16>
    %22 = vector.extract_strided_slice %2 {offsets = [1, 0], sizes = [16, 4], strides = [1, 1]} : vector<18x4xbf16> to vector<16x4xbf16>
    %23 = vector.extract_strided_slice %2 {offsets = [2, 0], sizes = [16, 4], strides = [1, 1]} : vector<18x4xbf16> to vector<16x4xbf16>
    %24 = vector.extract_strided_slice %4 {offsets = [0, 0], sizes = [16, 4], strides = [1, 1]} : vector<18x4xbf16> to vector<16x4xbf16>
    %25 = vector.extract_strided_slice %4 {offsets = [1, 0], sizes = [16, 4], strides = [1, 1]} : vector<18x4xbf16> to vector<16x4xbf16>
    %26 = vector.extract_strided_slice %4 {offsets = [2, 0], sizes = [16, 4], strides = [1, 1]} : vector<18x4xbf16> to vector<16x4xbf16>
    %27 = tpu.concatenate %21, %22, %23, %24, %25, %26 in 1 : vector<16x4xbf16>, vector<16x4xbf16>, vector<16x4xbf16>, vector<16x4xbf16>, vector<16x4xbf16>, vector<16x4xbf16> -> vector<16x24xbf16>
    %c0_34 = arith.constant 0 : index
    %c0_35 = arith.constant 0 : index
    %28 = vector.load %arg8[%c0_34, %c0_35] : memref<128x24xbf16, #tpu.memory_space<vmem>>, vector<16x24xbf16>
    tpu.vector_store %arg8[%c0_34, %c0_35], %27 {strides = array<i32>} : memref<128x24xbf16, #tpu.memory_space<vmem>>, vector<16x24xbf16>,
    %29 = vector.extract_strided_slice %4 {offsets = [0, 0], sizes = [16, 4], strides = [1, 1]} : vector<18x4xbf16> to vector<16x4xbf16>
    %30 = vector.extract_strided_slice %4 {offsets = [1, 0], sizes = [16, 4], strides = [1, 1]} : vector<18x4xbf16> to vector<16x4xbf16>
    %31 = vector.extract_strided_slice %4 {offsets = [2, 0], sizes = [16, 4], strides = [1, 1]} : vector<18x4xbf16> to vector<16x4xbf16>
    %32 = vector.extract_strided_slice %6 {offsets = [0, 0], sizes = [16, 4], strides = [1, 1]} : vector<18x4xbf16> to vector<16x4xbf16>
    %33 = vector.extract_strided_slice %6 {offsets = [1, 0], sizes = [16, 4], strides = [1, 1]} : vector<18x4xbf16> to vector<16x4xbf16>
    %34 = vector.extract_strided_slice %6 {offsets = [2, 0], sizes = [16, 4], strides = [1, 1]} : vector<18x4xbf16> to vector<16x4xbf16>
    %35 = tpu.concatenate %29, %30, %31, %32, %33, %34 in 1 : vector<16x4xbf16>, vector<16x4xbf16>, vector<16x4xbf16>, vector<16x4xbf16>, vector<16x4xbf16>, vector<16x4xbf16> -> vector<16x24xbf16>
    %c16 = arith.constant 16 : index
    %c0_36 = arith.constant 0 : index
    %36 = vector.load %arg8[%c16, %c0_36] : memref<128x24xbf16, #tpu.memory_space<vmem>>, vector<16x24xbf16>
    tpu.vector_store %arg8[%c16, %c0_36], %35 {strides = array<i32>} : memref<128x24xbf16, #tpu.memory_space<vmem>>, vector<16x24xbf16>,
    %37 = vector.extract_strided_slice %6 {offsets = [0, 0], sizes = [16, 4], strides = [1, 1]} : vector<18x4xbf16> to vector<16x4xbf16>
    %38 = vector.extract_strided_slice %6 {offsets = [1, 0], sizes = [16, 4], strides = [1, 1]} : vector<18x4xbf16> to vector<16x4xbf16>
    %39 = vector.extract_strided_slice %6 {offsets = [2, 0], sizes = [16, 4], strides = [1, 1]} : vector<18x4xbf16> to vector<16x4xbf16>
    %40 = vector.extract_strided_slice %8 {offsets = [0, 0], sizes = [16, 4], strides = [1, 1]} : vector<18x4xbf16> to vector<16x4xbf16>
    %41 = vector.extract_strided_slice %8 {offsets = [1, 0], sizes = [16, 4], strides = [1, 1]} : vector<18x4xbf16> to vector<16x4xbf16>
    %42 = vector.extract_strided_slice %8 {offsets = [2, 0], sizes = [16, 4], strides = [1, 1]} : vector<18x4xbf16> to vector<16x4xbf16>
    %43 = tpu.concatenate %37, %38, %39, %40, %41, %42 in 1 : vector<16x4xbf16>, vector<16x4xbf16>, vector<16x4xbf16>, vector<16x4xbf16>, vector<16x4xbf16>, vector<16x4xbf16> -> vector<16x24xbf16>
    %c32 = arith.constant 32 : index
    %c0_37 = arith.constant 0 : index
    %44 = vector.load %arg8[%c32, %c0_37] : memref<128x24xbf16, #tpu.memory_space<vmem>>, vector<16x24xbf16>
    tpu.vector_store %arg8[%c32, %c0_37], %43 {strides = array<i32>} : memref<128x24xbf16, #tpu.memory_space<vmem>>, vector<16x24xbf16>,
    %45 = vector.extract_strided_slice %8 {offsets = [0, 0], sizes = [16, 4], strides = [1, 1]} : vector<18x4xbf16> to vector<16x4xbf16>
    %46 = vector.extract_strided_slice %8 {offsets = [1, 0], sizes = [16, 4], strides = [1, 1]} : vector<18x4xbf16> to vector<16x4xbf16>
    %47 = vector.extract_strided_slice %8 {offsets = [2, 0], sizes = [16, 4], strides = [1, 1]} : vector<18x4xbf16> to vector<16x4xbf16>
    %48 = vector.extract_strided_slice %10 {offsets = [0, 0], sizes = [16, 4], strides = [1, 1]} : vector<18x4xbf16> to vector<16x4xbf16>
    %49 = vector.extract_strided_slice %10 {offsets = [1, 0], sizes = [16, 4], strides = [1, 1]} : vector<18x4xbf16> to vector<16x4xbf16>
    %50 = vector.extract_strided_slice %10 {offsets = [2, 0], sizes = [16, 4], strides = [1, 1]} : vector<18x4xbf16> to vector<16x4xbf16>
    %51 = tpu.concatenate %45, %46, %47, %48, %49, %50 in 1 : vector<16x4xbf16>, vector<16x4xbf16>, vector<16x4xbf16>, vector<16x4xbf16>, vector<16x4xbf16>, vector<16x4xbf16> -> vector<16x24xbf16>
    %c48 = arith.constant 48 : index
    %c0_38 = arith.constant 0 : index
    %52 = vector.load %arg8[%c48, %c0_38] : memref<128x24xbf16, #tpu.memory_space<vmem>>, vector<16x24xbf16>
    tpu.vector_store %arg8[%c48, %c0_38], %51 {strides = array<i32>} : memref<128x24xbf16, #tpu.memory_space<vmem>>, vector<16x24xbf16>,
    %53 = vector.extract_strided_slice %10 {offsets = [0, 0], sizes = [16, 4], strides = [1, 1]} : vector<18x4xbf16> to vector<16x4xbf16>
    %54 = vector.extract_strided_slice %10 {offsets = [1, 0], sizes = [16, 4], strides = [1, 1]} : vector<18x4xbf16> to vector<16x4xbf16>
    %55 = vector.extract_strided_slice %10 {offsets = [2, 0], sizes = [16, 4], strides = [1, 1]} : vector<18x4xbf16> to vector<16x4xbf16>
    %56 = vector.extract_strided_slice %12 {offsets = [0, 0], sizes = [16, 4], strides = [1, 1]} : vector<18x4xbf16> to vector<16x4xbf16>
    %57 = vector.extract_strided_slice %12 {offsets = [1, 0], sizes = [16, 4], strides = [1, 1]} : vector<18x4xbf16> to vector<16x4xbf16>
    %58 = vector.extract_strided_slice %12 {offsets = [2, 0], sizes = [16, 4], strides = [1, 1]} : vector<18x4xbf16> to vector<16x4xbf16>
    %59 = tpu.concatenate %53, %54, %55, %56, %57, %58 in 1 : vector<16x4xbf16>, vector<16x4xbf16>, vector<16x4xbf16>, vector<16x4xbf16>, vector<16x4xbf16>, vector<16x4xbf16> -> vector<16x24xbf16>
    %c64 = arith.constant 64 : index
    %c0_39 = arith.constant 0 : index
    %60 = vector.load %arg8[%c64, %c0_39] : memref<128x24xbf16, #tpu.memory_space<vmem>>, vector<16x24xbf16>
    tpu.vector_store %arg8[%c64, %c0_39], %59 {strides = array<i32>} : memref<128x24xbf16, #tpu.memory_space<vmem>>, vector<16x24xbf16>,
    %61 = vector.extract_strided_slice %12 {offsets = [0, 0], sizes = [16, 4], strides = [1, 1]} : vector<18x4xbf16> to vector<16x4xbf16>
    %62 = vector.extract_strided_slice %12 {offsets = [1, 0], sizes = [16, 4], strides = [1, 1]} : vector<18x4xbf16> to vector<16x4xbf16>
    %63 = vector.extract_strided_slice %12 {offsets = [2, 0], sizes = [16, 4], strides = [1, 1]} : vector<18x4xbf16> to vector<16x4xbf16>
    %64 = vector.extract_strided_slice %14 {offsets = [0, 0], sizes = [16, 4], strides = [1, 1]} : vector<18x4xbf16> to vector<16x4xbf16>
    %65 = vector.extract_strided_slice %14 {offsets = [1, 0], sizes = [16, 4], strides = [1, 1]} : vector<18x4xbf16> to vector<16x4xbf16>
    %66 = vector.extract_strided_slice %14 {offsets = [2, 0], sizes = [16, 4], strides = [1, 1]} : vector<18x4xbf16> to vector<16x4xbf16>
    %67 = tpu.concatenate %61, %62, %63, %64, %65, %66 in 1 : vector<16x4xbf16>, vector<16x4xbf16>, vector<16x4xbf16>, vector<16x4xbf16>, vector<16x4xbf16>, vector<16x4xbf16> -> vector<16x24xbf16>
    %c80 = arith.constant 80 : index
    %c0_40 = arith.constant 0 : index
    %68 = vector.load %arg8[%c80, %c0_40] : memref<128x24xbf16, #tpu.memory_space<vmem>>, vector<16x24xbf16>
    tpu.vector_store %arg8[%c80, %c0_40], %67 {strides = array<i32>} : memref<128x24xbf16, #tpu.memory_space<vmem>>, vector<16x24xbf16>,
    %69 = vector.extract_strided_slice %14 {offsets = [0, 0], sizes = [16, 4], strides = [1, 1]} : vector<18x4xbf16> to vector<16x4xbf16>
    %70 = vector.extract_strided_slice %14 {offsets = [1, 0], sizes = [16, 4], strides = [1, 1]} : vector<18x4xbf16> to vector<16x4xbf16>
    %71 = vector.extract_strided_slice %14 {offsets = [2, 0], sizes = [16, 4], strides = [1, 1]} : vector<18x4xbf16> to vector<16x4xbf16>
    %72 = vector.extract_strided_slice %16 {offsets = [0, 0], sizes = [16, 4], strides = [1, 1]} : vector<18x4xbf16> to vector<16x4xbf16>
    %73 = vector.extract_strided_slice %16 {offsets = [1, 0], sizes = [16, 4], strides = [1, 1]} : vector<18x4xbf16> to vector<16x4xbf16>
    %74 = vector.extract_strided_slice %16 {offsets = [2, 0], sizes = [16, 4], strides = [1, 1]} : vector<18x4xbf16> to vector<16x4xbf16>
    %75 = tpu.concatenate %69, %70, %71, %72, %73, %74 in 1 : vector<16x4xbf16>, vector<16x4xbf16>, vector<16x4xbf16>, vector<16x4xbf16>, vector<16x4xbf16>, vector<16x4xbf16> -> vector<16x24xbf16>
    %c96 = arith.constant 96 : index
    %c0_41 = arith.constant 0 : index
    %76 = vector.load %arg8[%c96, %c0_41] : memref<128x24xbf16, #tpu.memory_space<vmem>>, vector<16x24xbf16>
    tpu.vector_store %arg8[%c96, %c0_41], %75 {strides = array<i32>} : memref<128x24xbf16, #tpu.memory_space<vmem>>, vector<16x24xbf16>,
    %77 = vector.extract_strided_slice %16 {offsets = [0, 0], sizes = [16, 4], strides = [1, 1]} : vector<18x4xbf16> to vector<16x4xbf16>
    %78 = vector.extract_strided_slice %16 {offsets = [1, 0], sizes = [16, 4], strides = [1, 1]} : vector<18x4xbf16> to vector<16x4xbf16>
    %79 = vector.extract_strided_slice %16 {offsets = [2, 0], sizes = [16, 4], strides = [1, 1]} : vector<18x4xbf16> to vector<16x4xbf16>
    %80 = vector.extract_strided_slice %18 {offsets = [0, 0], sizes = [16, 4], strides = [1, 1]} : vector<18x4xbf16> to vector<16x4xbf16>
    %81 = vector.extract_strided_slice %18 {offsets = [1, 0], sizes = [16, 4], strides = [1, 1]} : vector<18x4xbf16> to vector<16x4xbf16>
    %82 = vector.extract_strided_slice %18 {offsets = [2, 0], sizes = [16, 4], strides = [1, 1]} : vector<18x4xbf16> to vector<16x4xbf16>
    %83 = tpu.concatenate %77, %78, %79, %80, %81, %82 in 1 : vector<16x4xbf16>, vector<16x4xbf16>, vector<16x4xbf16>, vector<16x4xbf16>, vector<16x4xbf16>, vector<16x4xbf16> -> vector<16x24xbf16>
    %c112 = arith.constant 112 : index
    %c0_42 = arith.constant 0 : index
    %84 = vector.load %arg8[%c112, %c0_42] : memref<128x24xbf16, #tpu.memory_space<vmem>>, vector<16x24xbf16>
    tpu.vector_store %arg8[%c112, %c0_42], %83 {strides = array<i32>} : memref<128x24xbf16, #tpu.memory_space<vmem>>, vector<16x24xbf16>,
    %c0_43 = arith.constant 0 : index
    %c0_44 = arith.constant 0 : index
    %85 = vector.load %arg8[%c0_43, %c0_44] : memref<128x24xbf16, #tpu.memory_space<vmem>>, vector<128x24xbf16>
    %c0_45 = arith.constant 0 : index
    %c0_46 = arith.constant 0 : index
    %c0_47 = arith.constant 0 : index
    %86 = vector.load %arg5[%c0_45, %c0_46, %c0_47] : memref<2x24x16xbf16, #tpu.memory_space<vmem>>, vector<1x24x16xbf16>
    %87 = vector.shape_cast %86 : vector<1x24x16xbf16> to vector<24x16xbf16>
    %cst = arith.constant dense<0.000000e+00> : vector<128x16xf32>
    %88 = tpu.matmul %85, %87, %cst {dimension_numbers = #tpu.dot_dimension_numbers<[1], [0], [0], [1], [0, 0, 1, 1], [], []>} : vector<128x24xbf16>, vector<24x16xbf16>, vector<128x16xf32> -> vector<128x16xf32>
    %89 = vector.broadcast %0 : vector<1x16xf32> to vector<128x16xf32>
    %90 = arith.addf %88, %89 : vector<128x16xf32>
    %91 = vector.extract_strided_slice %90 {offsets = [0, 0], sizes = [16, 16], strides = [1, 1]} : vector<128x16xf32> to vector<16x16xf32>
    %c0_48 = arith.constant 0 : index
    %c0_49 = arith.constant 0 : index
    %c0_50 = arith.constant 0 : index
    %c0_51 = arith.constant 0 : index
    %92 = vector.load %arg7[%c0_48, %c0_49, %c0_50, %c0_51] : memref<1x16x16x16xf32, #tpu.memory_space<vmem>>, vector<1x1x16x16xf32>
    %93 = vector.shape_cast %92 : vector<1x1x16x16xf32> to vector<16x16xf32>
    %94 = vector.shape_cast %91 : vector<16x16xf32> to vector<1x1x16x16xf32>
    tpu.vector_store %arg7[%c0_48, %c0_49, %c0_50, %c0_51], %94 {strides = array<i32>} : memref<1x16x16x16xf32, #tpu.memory_space<vmem>>, vector<1x1x16x16xf32>,
    %95 = vector.extract_strided_slice %90 {offsets = [16, 0], sizes = [16, 16], strides = [1, 1]} : vector<128x16xf32> to vector<16x16xf32>
    %c0_52 = arith.constant 0 : index
    %c2_53 = arith.constant 2 : index
    %c0_54 = arith.constant 0 : index
    %c0_55 = arith.constant 0 : index
    %96 = vector.load %arg7[%c0_52, %c2_53, %c0_54, %c0_55] : memref<1x16x16x16xf32, #tpu.memory_space<vmem>>, vector<1x1x16x16xf32>
    %97 = vector.shape_cast %96 : vector<1x1x16x16xf32> to vector<16x16xf32>
    %98 = vector.shape_cast %95 : vector<16x16xf32> to vector<1x1x16x16xf32>
    tpu.vector_store %arg7[%c0_52, %c2_53, %c0_54, %c0_55], %98 {strides = array<i32>} : memref<1x16x16x16xf32, #tpu.memory_space<vmem>>, vector<1x1x16x16xf32>,
    %99 = vector.extract_strided_slice %90 {offsets = [32, 0], sizes = [16, 16], strides = [1, 1]} : vector<128x16xf32> to vector<16x16xf32>
    %c0_56 = arith.constant 0 : index
    %c4_57 = arith.constant 4 : index
    %c0_58 = arith.constant 0 : index
    %c0_59 = arith.constant 0 : index
    %100 = vector.load %arg7[%c0_56, %c4_57, %c0_58, %c0_59] : memref<1x16x16x16xf32, #tpu.memory_space<vmem>>, vector<1x1x16x16xf32>
    %101 = vector.shape_cast %100 : vector<1x1x16x16xf32> to vector<16x16xf32>
    %102 = vector.shape_cast %99 : vector<16x16xf32> to vector<1x1x16x16xf32>
    tpu.vector_store %arg7[%c0_56, %c4_57, %c0_58, %c0_59], %102 {strides = array<i32>} : memref<1x16x16x16xf32, #tpu.memory_space<vmem>>, vector<1x1x16x16xf32>,
    %103 = vector.extract_strided_slice %90 {offsets = [48, 0], sizes = [16, 16], strides = [1, 1]} : vector<128x16xf32> to vector<16x16xf32>
    %c0_60 = arith.constant 0 : index
    %c6_61 = arith.constant 6 : index
    %c0_62 = arith.constant 0 : index
    %c0_63 = arith.constant 0 : index
    %104 = vector.load %arg7[%c0_60, %c6_61, %c0_62, %c0_63] : memref<1x16x16x16xf32, #tpu.memory_space<vmem>>, vector<1x1x16x16xf32>
    %105 = vector.shape_cast %104 : vector<1x1x16x16xf32> to vector<16x16xf32>
    %106 = vector.shape_cast %103 : vector<16x16xf32> to vector<1x1x16x16xf32>
    tpu.vector_store %arg7[%c0_60, %c6_61, %c0_62, %c0_63], %106 {strides = array<i32>} : memref<1x16x16x16xf32, #tpu.memory_space<vmem>>, vector<1x1x16x16xf32>,
    %107 = vector.extract_strided_slice %90 {offsets = [64, 0], sizes = [16, 16], strides = [1, 1]} : vector<128x16xf32> to vector<16x16xf32>
    %c0_64 = arith.constant 0 : index
    %c8 = arith.constant 8 : index
    %c0_65 = arith.constant 0 : index
    %c0_66 = arith.constant 0 : index
    %108 = vector.load %arg7[%c0_64, %c8, %c0_65, %c0_66] : memref<1x16x16x16xf32, #tpu.memory_space<vmem>>, vector<1x1x16x16xf32>
    %109 = vector.shape_cast %108 : vector<1x1x16x16xf32> to vector<16x16xf32>
    %110 = vector.shape_cast %107 : vector<16x16xf32> to vector<1x1x16x16xf32>
    tpu.vector_store %arg7[%c0_64, %c8, %c0_65, %c0_66], %110 {strides = array<i32>} : memref<1x16x16x16xf32, #tpu.memory_space<vmem>>, vector<1x1x16x16xf32>,
    %111 = vector.extract_strided_slice %90 {offsets = [80, 0], sizes = [16, 16], strides = [1, 1]} : vector<128x16xf32> to vector<16x16xf32>
    %c0_67 = arith.constant 0 : index
    %c10 = arith.constant 10 : index
    %c0_68 = arith.constant 0 : index
    %c0_69 = arith.constant 0 : index
    %112 = vector.load %arg7[%c0_67, %c10, %c0_68, %c0_69] : memref<1x16x16x16xf32, #tpu.memory_space<vmem>>, vector<1x1x16x16xf32>
    %113 = vector.shape_cast %112 : vector<1x1x16x16xf32> to vector<16x16xf32>
    %114 = vector.shape_cast %111 : vector<16x16xf32> to vector<1x1x16x16xf32>
    tpu.vector_store %arg7[%c0_67, %c10, %c0_68, %c0_69], %114 {strides = array<i32>} : memref<1x16x16x16xf32, #tpu.memory_space<vmem>>, vector<1x1x16x16xf32>,
    %115 = vector.extract_strided_slice %90 {offsets = [96, 0], sizes = [16, 16], strides = [1, 1]} : vector<128x16xf32> to vector<16x16xf32>
    %c0_70 = arith.constant 0 : index
    %c12 = arith.constant 12 : index
    %c0_71 = arith.constant 0 : index
    %c0_72 = arith.constant 0 : index
    %116 = vector.load %arg7[%c0_70, %c12, %c0_71, %c0_72] : memref<1x16x16x16xf32, #tpu.memory_space<vmem>>, vector<1x1x16x16xf32>
    %117 = vector.shape_cast %116 : vector<1x1x16x16xf32> to vector<16x16xf32>
    %118 = vector.shape_cast %115 : vector<16x16xf32> to vector<1x1x16x16xf32>
    tpu.vector_store %arg7[%c0_70, %c12, %c0_71, %c0_72], %118 {strides = array<i32>} : memref<1x16x16x16xf32, #tpu.memory_space<vmem>>, vector<1x1x16x16xf32>,
    %119 = vector.extract_strided_slice %90 {offsets = [112, 0], sizes = [16, 16], strides = [1, 1]} : vector<128x16xf32> to vector<16x16xf32>
    %c0_73 = arith.constant 0 : index
    %c14 = arith.constant 14 : index
    %c0_74 = arith.constant 0 : index
    %c0_75 = arith.constant 0 : index
    %120 = vector.load %arg7[%c0_73, %c14, %c0_74, %c0_75] : memref<1x16x16x16xf32, #tpu.memory_space<vmem>>, vector<1x1x16x16xf32>
    %121 = vector.shape_cast %120 : vector<1x1x16x16xf32> to vector<16x16xf32>
    %122 = vector.shape_cast %119 : vector<16x16xf32> to vector<1x1x16x16xf32>
    tpu.vector_store %arg7[%c0_73, %c14, %c0_74, %c0_75], %122 {strides = array<i32>} : memref<1x16x16x16xf32, #tpu.memory_space<vmem>>, vector<1x1x16x16xf32>,
    %123 = vector.extract_strided_slice %4 {offsets = [0, 0], sizes = [16, 4], strides = [1, 1]} : vector<18x4xbf16> to vector<16x4xbf16>
    %124 = vector.extract_strided_slice %4 {offsets = [1, 0], sizes = [16, 4], strides = [1, 1]} : vector<18x4xbf16> to vector<16x4xbf16>
    %125 = vector.extract_strided_slice %4 {offsets = [2, 0], sizes = [16, 4], strides = [1, 1]} : vector<18x4xbf16> to vector<16x4xbf16>
    %126 = vector.extract_strided_slice %6 {offsets = [0, 0], sizes = [16, 4], strides = [1, 1]} : vector<18x4xbf16> to vector<16x4xbf16>
    %127 = vector.extract_strided_slice %6 {offsets = [1, 0], sizes = [16, 4], strides = [1, 1]} : vector<18x4xbf16> to vector<16x4xbf16>
    %128 = vector.extract_strided_slice %6 {offsets = [2, 0], sizes = [16, 4], strides = [1, 1]} : vector<18x4xbf16> to vector<16x4xbf16>
    %129 = tpu.concatenate %123, %124, %125, %126, %127, %128 in 1 : vector<16x4xbf16>, vector<16x4xbf16>, vector<16x4xbf16>, vector<16x4xbf16>, vector<16x4xbf16>, vector<16x4xbf16> -> vector<16x24xbf16>
    %c0_76 = arith.constant 0 : index
    %c0_77 = arith.constant 0 : index
    %130 = vector.load %arg8[%c0_76, %c0_77] : memref<128x24xbf16, #tpu.memory_space<vmem>>, vector<16x24xbf16>
    tpu.vector_store %arg8[%c0_76, %c0_77], %129 {strides = array<i32>} : memref<128x24xbf16, #tpu.memory_space<vmem>>, vector<16x24xbf16>,
    %131 = vector.extract_strided_slice %6 {offsets = [0, 0], sizes = [16, 4], strides = [1, 1]} : vector<18x4xbf16> to vector<16x4xbf16>
    %132 = vector.extract_strided_slice %6 {offsets = [1, 0], sizes = [16, 4], strides = [1, 1]} : vector<18x4xbf16> to vector<16x4xbf16>
    %133 = vector.extract_strided_slice %6 {offsets = [2, 0], sizes = [16, 4], strides = [1, 1]} : vector<18x4xbf16> to vector<16x4xbf16>
    %134 = vector.extract_strided_slice %8 {offsets = [0, 0], sizes = [16, 4], strides = [1, 1]} : vector<18x4xbf16> to vector<16x4xbf16>
    %135 = vector.extract_strided_slice %8 {offsets = [1, 0], sizes = [16, 4], strides = [1, 1]} : vector<18x4xbf16> to vector<16x4xbf16>
    %136 = vector.extract_strided_slice %8 {offsets = [2, 0], sizes = [16, 4], strides = [1, 1]} : vector<18x4xbf16> to vector<16x4xbf16>
    %137 = tpu.concatenate %131, %132, %133, %134, %135, %136 in 1 : vector<16x4xbf16>, vector<16x4xbf16>, vector<16x4xbf16>, vector<16x4xbf16>, vector<16x4xbf16>, vector<16x4xbf16> -> vector<16x24xbf16>
    %c16_78 = arith.constant 16 : index
    %c0_79 = arith.constant 0 : index
    %138 = vector.load %arg8[%c16_78, %c0_79] : memref<128x24xbf16, #tpu.memory_space<vmem>>, vector<16x24xbf16>
    tpu.vector_store %arg8[%c16_78, %c0_79], %137 {strides = array<i32>} : memref<128x24xbf16, #tpu.memory_space<vmem>>, vector<16x24xbf16>,
    %139 = vector.extract_strided_slice %8 {offsets = [0, 0], sizes = [16, 4], strides = [1, 1]} : vector<18x4xbf16> to vector<16x4xbf16>
    %140 = vector.extract_strided_slice %8 {offsets = [1, 0], sizes = [16, 4], strides = [1, 1]} : vector<18x4xbf16> to vector<16x4xbf16>
    %141 = vector.extract_strided_slice %8 {offsets = [2, 0], sizes = [16, 4], strides = [1, 1]} : vector<18x4xbf16> to vector<16x4xbf16>
    %142 = vector.extract_strided_slice %10 {offsets = [0, 0], sizes = [16, 4], strides = [1, 1]} : vector<18x4xbf16> to vector<16x4xbf16>
    %143 = vector.extract_strided_slice %10 {offsets = [1, 0], sizes = [16, 4], strides = [1, 1]} : vector<18x4xbf16> to vector<16x4xbf16>
    %144 = vector.extract_strided_slice %10 {offsets = [2, 0], sizes = [16, 4], strides = [1, 1]} : vector<18x4xbf16> to vector<16x4xbf16>
    %145 = tpu.concatenate %139, %140, %141, %142, %143, %144 in 1 : vector<16x4xbf16>, vector<16x4xbf16>, vector<16x4xbf16>, vector<16x4xbf16>, vector<16x4xbf16>, vector<16x4xbf16> -> vector<16x24xbf16>
    %c32_80 = arith.constant 32 : index
    %c0_81 = arith.constant 0 : index
    %146 = vector.load %arg8[%c32_80, %c0_81] : memref<128x24xbf16, #tpu.memory_space<vmem>>, vector<16x24xbf16>
    tpu.vector_store %arg8[%c32_80, %c0_81], %145 {strides = array<i32>} : memref<128x24xbf16, #tpu.memory_space<vmem>>, vector<16x24xbf16>,
    %147 = vector.extract_strided_slice %10 {offsets = [0, 0], sizes = [16, 4], strides = [1, 1]} : vector<18x4xbf16> to vector<16x4xbf16>
    %148 = vector.extract_strided_slice %10 {offsets = [1, 0], sizes = [16, 4], strides = [1, 1]} : vector<18x4xbf16> to vector<16x4xbf16>
    %149 = vector.extract_strided_slice %10 {offsets = [2, 0], sizes = [16, 4], strides = [1, 1]} : vector<18x4xbf16> to vector<16x4xbf16>
    %150 = vector.extract_strided_slice %12 {offsets = [0, 0], sizes = [16, 4], strides = [1, 1]} : vector<18x4xbf16> to vector<16x4xbf16>
    %151 = vector.extract_strided_slice %12 {offsets = [1, 0], sizes = [16, 4], strides = [1, 1]} : vector<18x4xbf16> to vector<16x4xbf16>
    %152 = vector.extract_strided_slice %12 {offsets = [2, 0], sizes = [16, 4], strides = [1, 1]} : vector<18x4xbf16> to vector<16x4xbf16>
    %153 = tpu.concatenate %147, %148, %149, %150, %151, %152 in 1 : vector<16x4xbf16>, vector<16x4xbf16>, vector<16x4xbf16>, vector<16x4xbf16>, vector<16x4xbf16>, vector<16x4xbf16> -> vector<16x24xbf16>
    %c48_82 = arith.constant 48 : index
    %c0_83 = arith.constant 0 : index
    %154 = vector.load %arg8[%c48_82, %c0_83] : memref<128x24xbf16, #tpu.memory_space<vmem>>, vector<16x24xbf16>
    tpu.vector_store %arg8[%c48_82, %c0_83], %153 {strides = array<i32>} : memref<128x24xbf16, #tpu.memory_space<vmem>>, vector<16x24xbf16>,
    %155 = vector.extract_strided_slice %12 {offsets = [0, 0], sizes = [16, 4], strides = [1, 1]} : vector<18x4xbf16> to vector<16x4xbf16>
    %156 = vector.extract_strided_slice %12 {offsets = [1, 0], sizes = [16, 4], strides = [1, 1]} : vector<18x4xbf16> to vector<16x4xbf16>
    %157 = vector.extract_strided_slice %12 {offsets = [2, 0], sizes = [16, 4], strides = [1, 1]} : vector<18x4xbf16> to vector<16x4xbf16>
    %158 = vector.extract_strided_slice %14 {offsets = [0, 0], sizes = [16, 4], strides = [1, 1]} : vector<18x4xbf16> to vector<16x4xbf16>
    %159 = vector.extract_strided_slice %14 {offsets = [1, 0], sizes = [16, 4], strides = [1, 1]} : vector<18x4xbf16> to vector<16x4xbf16>
    %160 = vector.extract_strided_slice %14 {offsets = [2, 0], sizes = [16, 4], strides = [1, 1]} : vector<18x4xbf16> to vector<16x4xbf16>
    %161 = tpu.concatenate %155, %156, %157, %158, %159, %160 in 1 : vector<16x4xbf16>, vector<16x4xbf16>, vector<16x4xbf16>, vector<16x4xbf16>, vector<16x4xbf16>, vector<16x4xbf16> -> vector<16x24xbf16>
    %c64_84 = arith.constant 64 : index
    %c0_85 = arith.constant 0 : index
    %162 = vector.load %arg8[%c64_84, %c0_85] : memref<128x24xbf16, #tpu.memory_space<vmem>>, vector<16x24xbf16>
    tpu.vector_store %arg8[%c64_84, %c0_85], %161 {strides = array<i32>} : memref<128x24xbf16, #tpu.memory_space<vmem>>, vector<16x24xbf16>,
    %163 = vector.extract_strided_slice %14 {offsets = [0, 0], sizes = [16, 4], strides = [1, 1]} : vector<18x4xbf16> to vector<16x4xbf16>
    %164 = vector.extract_strided_slice %14 {offsets = [1, 0], sizes = [16, 4], strides = [1, 1]} : vector<18x4xbf16> to vector<16x4xbf16>
    %165 = vector.extract_strided_slice %14 {offsets = [2, 0], sizes = [16, 4], strides = [1, 1]} : vector<18x4xbf16> to vector<16x4xbf16>
    %166 = vector.extract_strided_slice %16 {offsets = [0, 0], sizes = [16, 4], strides = [1, 1]} : vector<18x4xbf16> to vector<16x4xbf16>
    %167 = vector.extract_strided_slice %16 {offsets = [1, 0], sizes = [16, 4], strides = [1, 1]} : vector<18x4xbf16> to vector<16x4xbf16>
    %168 = vector.extract_strided_slice %16 {offsets = [2, 0], sizes = [16, 4], strides = [1, 1]} : vector<18x4xbf16> to vector<16x4xbf16>
    %169 = tpu.concatenate %163, %164, %165, %166, %167, %168 in 1 : vector<16x4xbf16>, vector<16x4xbf16>, vector<16x4xbf16>, vector<16x4xbf16>, vector<16x4xbf16>, vector<16x4xbf16> -> vector<16x24xbf16>
    %c80_86 = arith.constant 80 : index
    %c0_87 = arith.constant 0 : index
    %170 = vector.load %arg8[%c80_86, %c0_87] : memref<128x24xbf16, #tpu.memory_space<vmem>>, vector<16x24xbf16>
    tpu.vector_store %arg8[%c80_86, %c0_87], %169 {strides = array<i32>} : memref<128x24xbf16, #tpu.memory_space<vmem>>, vector<16x24xbf16>,
    %171 = vector.extract_strided_slice %16 {offsets = [0, 0], sizes = [16, 4], strides = [1, 1]} : vector<18x4xbf16> to vector<16x4xbf16>
    %172 = vector.extract_strided_slice %16 {offsets = [1, 0], sizes = [16, 4], strides = [1, 1]} : vector<18x4xbf16> to vector<16x4xbf16>
    %173 = vector.extract_strided_slice %16 {offsets = [2, 0], sizes = [16, 4], strides = [1, 1]} : vector<18x4xbf16> to vector<16x4xbf16>
    %174 = vector.extract_strided_slice %18 {offsets = [0, 0], sizes = [16, 4], strides = [1, 1]} : vector<18x4xbf16> to vector<16x4xbf16>
    %175 = vector.extract_strided_slice %18 {offsets = [1, 0], sizes = [16, 4], strides = [1, 1]} : vector<18x4xbf16> to vector<16x4xbf16>
    %176 = vector.extract_strided_slice %18 {offsets = [2, 0], sizes = [16, 4], strides = [1, 1]} : vector<18x4xbf16> to vector<16x4xbf16>
    %177 = tpu.concatenate %171, %172, %173, %174, %175, %176 in 1 : vector<16x4xbf16>, vector<16x4xbf16>, vector<16x4xbf16>, vector<16x4xbf16>, vector<16x4xbf16>, vector<16x4xbf16> -> vector<16x24xbf16>
    %c96_88 = arith.constant 96 : index
    %c0_89 = arith.constant 0 : index
    %178 = vector.load %arg8[%c96_88, %c0_89] : memref<128x24xbf16, #tpu.memory_space<vmem>>, vector<16x24xbf16>
    tpu.vector_store %arg8[%c96_88, %c0_89], %177 {strides = array<i32>} : memref<128x24xbf16, #tpu.memory_space<vmem>>, vector<16x24xbf16>,
    %179 = vector.extract_strided_slice %18 {offsets = [0, 0], sizes = [16, 4], strides = [1, 1]} : vector<18x4xbf16> to vector<16x4xbf16>
    %180 = vector.extract_strided_slice %18 {offsets = [1, 0], sizes = [16, 4], strides = [1, 1]} : vector<18x4xbf16> to vector<16x4xbf16>
    %181 = vector.extract_strided_slice %18 {offsets = [2, 0], sizes = [16, 4], strides = [1, 1]} : vector<18x4xbf16> to vector<16x4xbf16>
    %182 = vector.extract_strided_slice %20 {offsets = [0, 0], sizes = [16, 4], strides = [1, 1]} : vector<18x4xbf16> to vector<16x4xbf16>
    %183 = vector.extract_strided_slice %20 {offsets = [1, 0], sizes = [16, 4], strides = [1, 1]} : vector<18x4xbf16> to vector<16x4xbf16>
    %184 = vector.extract_strided_slice %20 {offsets = [2, 0], sizes = [16, 4], strides = [1, 1]} : vector<18x4xbf16> to vector<16x4xbf16>
    %185 = tpu.concatenate %179, %180, %181, %182, %183, %184 in 1 : vector<16x4xbf16>, vector<16x4xbf16>, vector<16x4xbf16>, vector<16x4xbf16>, vector<16x4xbf16>, vector<16x4xbf16> -> vector<16x24xbf16>
    %c112_90 = arith.constant 112 : index
    %c0_91 = arith.constant 0 : index
    %186 = vector.load %arg8[%c112_90, %c0_91] : memref<128x24xbf16, #tpu.memory_space<vmem>>, vector<16x24xbf16>
    tpu.vector_store %arg8[%c112_90, %c0_91], %185 {strides = array<i32>} : memref<128x24xbf16, #tpu.memory_space<vmem>>, vector<16x24xbf16>,
    %c0_92 = arith.constant 0 : index
    %c0_93 = arith.constant 0 : index
    %187 = vector.load %arg8[%c0_92, %c0_93] : memref<128x24xbf16, #tpu.memory_space<vmem>>, vector<128x24xbf16>
    %c1_94 = arith.constant 1 : index
    %c0_95 = arith.constant 0 : index
    %c0_96 = arith.constant 0 : index
    %188 = vector.load %arg5[%c1_94, %c0_95, %c0_96] : memref<2x24x16xbf16, #tpu.memory_space<vmem>>, vector<1x24x16xbf16>
    %189 = vector.shape_cast %188 : vector<1x24x16xbf16> to vector<24x16xbf16>
    %cst_97 = arith.constant dense<0.000000e+00> : vector<128x16xf32>
    %190 = tpu.matmul %187, %189, %cst_97 {dimension_numbers = #tpu.dot_dimension_numbers<[1], [0], [0], [1], [0, 0, 1, 1], [], []>} : vector<128x24xbf16>, vector<24x16xbf16>, vector<128x16xf32> -> vector<128x16xf32>
    %191 = vector.broadcast %0 : vector<1x16xf32> to vector<128x16xf32>
    %192 = arith.addf %190, %191 : vector<128x16xf32>
    %193 = vector.extract_strided_slice %192 {offsets = [0, 0], sizes = [16, 16], strides = [1, 1]} : vector<128x16xf32> to vector<16x16xf32>
    %c0_98 = arith.constant 0 : index
    %c1_99 = arith.constant 1 : index
    %c0_100 = arith.constant 0 : index
    %c0_101 = arith.constant 0 : index
    %194 = vector.load %arg7[%c0_98, %c1_99, %c0_100, %c0_101] : memref<1x16x16x16xf32, #tpu.memory_space<vmem>>, vector<1x1x16x16xf32>
    %195 = vector.shape_cast %194 : vector<1x1x16x16xf32> to vector<16x16xf32>
    %196 = vector.shape_cast %193 : vector<16x16xf32> to vector<1x1x16x16xf32>
    tpu.vector_store %arg7[%c0_98, %c1_99, %c0_100, %c0_101], %196 {strides = array<i32>} : memref<1x16x16x16xf32, #tpu.memory_space<vmem>>, vector<1x1x16x16xf32>,
    %197 = vector.extract_strided_slice %192 {offsets = [16, 0], sizes = [16, 16], strides = [1, 1]} : vector<128x16xf32> to vector<16x16xf32>
    %c0_102 = arith.constant 0 : index
    %c3_103 = arith.constant 3 : index
    %c0_104 = arith.constant 0 : index
    %c0_105 = arith.constant 0 : index
    %198 = vector.load %arg7[%c0_102, %c3_103, %c0_104, %c0_105] : memref<1x16x16x16xf32, #tpu.memory_space<vmem>>, vector<1x1x16x16xf32>
    %199 = vector.shape_cast %198 : vector<1x1x16x16xf32> to vector<16x16xf32>
    %200 = vector.shape_cast %197 : vector<16x16xf32> to vector<1x1x16x16xf32>
    tpu.vector_store %arg7[%c0_102, %c3_103, %c0_104, %c0_105], %200 {strides = array<i32>} : memref<1x16x16x16xf32, #tpu.memory_space<vmem>>, vector<1x1x16x16xf32>,
    %201 = vector.extract_strided_slice %192 {offsets = [32, 0], sizes = [16, 16], strides = [1, 1]} : vector<128x16xf32> to vector<16x16xf32>
    %c0_106 = arith.constant 0 : index
    %c5_107 = arith.constant 5 : index
    %c0_108 = arith.constant 0 : index
    %c0_109 = arith.constant 0 : index
    %202 = vector.load %arg7[%c0_106, %c5_107, %c0_108, %c0_109] : memref<1x16x16x16xf32, #tpu.memory_space<vmem>>, vector<1x1x16x16xf32>
    %203 = vector.shape_cast %202 : vector<1x1x16x16xf32> to vector<16x16xf32>
    %204 = vector.shape_cast %201 : vector<16x16xf32> to vector<1x1x16x16xf32>
    tpu.vector_store %arg7[%c0_106, %c5_107, %c0_108, %c0_109], %204 {strides = array<i32>} : memref<1x16x16x16xf32, #tpu.memory_space<vmem>>, vector<1x1x16x16xf32>,
    %205 = vector.extract_strided_slice %192 {offsets = [48, 0], sizes = [16, 16], strides = [1, 1]} : vector<128x16xf32> to vector<16x16xf32>
    %c0_110 = arith.constant 0 : index
    %c7_111 = arith.constant 7 : index
    %c0_112 = arith.constant 0 : index
    %c0_113 = arith.constant 0 : index
    %206 = vector.load %arg7[%c0_110, %c7_111, %c0_112, %c0_113] : memref<1x16x16x16xf32, #tpu.memory_space<vmem>>, vector<1x1x16x16xf32>
    %207 = vector.shape_cast %206 : vector<1x1x16x16xf32> to vector<16x16xf32>
    %208 = vector.shape_cast %205 : vector<16x16xf32> to vector<1x1x16x16xf32>
    tpu.vector_store %arg7[%c0_110, %c7_111, %c0_112, %c0_113], %208 {strides = array<i32>} : memref<1x16x16x16xf32, #tpu.memory_space<vmem>>, vector<1x1x16x16xf32>,
    %209 = vector.extract_strided_slice %192 {offsets = [64, 0], sizes = [16, 16], strides = [1, 1]} : vector<128x16xf32> to vector<16x16xf32>
    %c0_114 = arith.constant 0 : index
    %c9 = arith.constant 9 : index
    %c0_115 = arith.constant 0 : index
    %c0_116 = arith.constant 0 : index
    %210 = vector.load %arg7[%c0_114, %c9, %c0_115, %c0_116] : memref<1x16x16x16xf32, #tpu.memory_space<vmem>>, vector<1x1x16x16xf32>
    %211 = vector.shape_cast %210 : vector<1x1x16x16xf32> to vector<16x16xf32>
    %212 = vector.shape_cast %209 : vector<16x16xf32> to vector<1x1x16x16xf32>
    tpu.vector_store %arg7[%c0_114, %c9, %c0_115, %c0_116], %212 {strides = array<i32>} : memref<1x16x16x16xf32, #tpu.memory_space<vmem>>, vector<1x1x16x16xf32>,
    %213 = vector.extract_strided_slice %192 {offsets = [80, 0], sizes = [16, 16], strides = [1, 1]} : vector<128x16xf32> to vector<16x16xf32>
    %c0_117 = arith.constant 0 : index
    %c11 = arith.constant 11 : index
    %c0_118 = arith.constant 0 : index
    %c0_119 = arith.constant 0 : index
    %214 = vector.load %arg7[%c0_117, %c11, %c0_118, %c0_119] : memref<1x16x16x16xf32, #tpu.memory_space<vmem>>, vector<1x1x16x16xf32>
    %215 = vector.shape_cast %214 : vector<1x1x16x16xf32> to vector<16x16xf32>
    %216 = vector.shape_cast %213 : vector<16x16xf32> to vector<1x1x16x16xf32>
    tpu.vector_store %arg7[%c0_117, %c11, %c0_118, %c0_119], %216 {strides = array<i32>} : memref<1x16x16x16xf32, #tpu.memory_space<vmem>>, vector<1x1x16x16xf32>,
    %217 = vector.extract_strided_slice %192 {offsets = [96, 0], sizes = [16, 16], strides = [1, 1]} : vector<128x16xf32> to vector<16x16xf32>
    %c0_120 = arith.constant 0 : index
    %c13 = arith.constant 13 : index
    %c0_121 = arith.constant 0 : index
    %c0_122 = arith.constant 0 : index
    %218 = vector.load %arg7[%c0_120, %c13, %c0_121, %c0_122] : memref<1x16x16x16xf32, #tpu.memory_space<vmem>>, vector<1x1x16x16xf32>
    %219 = vector.shape_cast %218 : vector<1x1x16x16xf32> to vector<16x16xf32>
    %220 = vector.shape_cast %217 : vector<16x16xf32> to vector<1x1x16x16xf32>
    tpu.vector_store %arg7[%c0_120, %c13, %c0_121, %c0_122], %220 {strides = array<i32>} : memref<1x16x16x16xf32, #tpu.memory_space<vmem>>, vector<1x1x16x16xf32>,
    %221 = vector.extract_strided_slice %192 {offsets = [112, 0], sizes = [16, 16], strides = [1, 1]} : vector<128x16xf32> to vector<16x16xf32>
    %c0_123 = arith.constant 0 : index
    %c15 = arith.constant 15 : index
    %c0_124 = arith.constant 0 : index
    %c0_125 = arith.constant 0 : index
    %222 = vector.load %arg7[%c0_123, %c15, %c0_124, %c0_125] : memref<1x16x16x16xf32, #tpu.memory_space<vmem>>, vector<1x1x16x16xf32>
    %223 = vector.shape_cast %222 : vector<1x1x16x16xf32> to vector<16x16xf32>
    %224 = vector.shape_cast %221 : vector<16x16xf32> to vector<1x1x16x16xf32>
    tpu.vector_store %arg7[%c0_123, %c15, %c0_124, %c0_125], %224 {strides = array<i32>} : memref<1x16x16x16xf32, #tpu.memory_space<vmem>>, vector<1x1x16x16xf32>,
    return
  }
  func.func @transform_0(%arg0: i32, %arg1: i32) -> (i32, i32, i32, i32) {
    %c0_i32 = arith.constant 0 : i32
    %c0_i32_0 = arith.constant 0 : i32
    %c0_i32_1 = arith.constant 0 : i32
    return %arg0, %arg1, %c0_i32, %c0_i32_0 : i32, i32, i32, i32
  }
  func.func @transform_1(%arg0: i32, %arg1: i32) -> (i32, i32, i32, i32) {
    %c1_i32 = arith.constant 1 : i32
    %0 = arith.addi %arg1, %c1_i32 : i32
    %c8_i32 = arith.constant 8 : i32
    %1 = arith.muli %0, %c8_i32 : i32
    %c0_i32 = arith.constant 0 : i32
    %c0_i32_0 = arith.constant 0 : i32
    %c0_i32_1 = arith.constant 0 : i32
    return %arg0, %1, %c0_i32, %c0_i32_0 : i32, i32, i32, i32
  }
  func.func @transform_2(%arg0: i32, %arg1: i32) -> (i32, i32, i32, i32) {
    %c1_i32 = arith.constant 1 : i32
    %0 = arith.addi %arg1, %c1_i32 : i32
    %c8_i32 = arith.constant 8 : i32
    %1 = arith.muli %0, %c8_i32 : i32
    %c1_i32_0 = arith.constant 1 : i32
    %2 = arith.addi %1, %c1_i32_0 : i32
    %c0_i32 = arith.constant 0 : i32
    %c0_i32_1 = arith.constant 0 : i32
    %c0_i32_2 = arith.constant 0 : i32
    return %arg0, %2, %c0_i32, %c0_i32_1 : i32, i32, i32, i32
  }
  func.func @transform_3(%arg0: i32, %arg1: i32) -> (i32, i32, i32) {
    %c0_i32 = arith.constant 0 : i32
    %c0_i32_0 = arith.constant 0 : i32
    %c0_i32_1 = arith.constant 0 : i32
    %c0_i32_2 = arith.constant 0 : i32
    return %c0_i32, %c0_i32_0, %c0_i32_1 : i32, i32, i32
  }
  func.func @transform_4(%arg0: i32, %arg1: i32) -> (i32, i32) {
    %c0_i32 = arith.constant 0 : i32
    %c0_i32_0 = arith.constant 0 : i32
    %c0_i32_1 = arith.constant 0 : i32
    return %c0_i32, %c0_i32_0 : i32, i32
  }
  func.func @transform_5(%arg0: i32, %arg1: i32) -> (i32, i32, i32, i32) {
    %c0_i32 = arith.constant 0 : i32
    %c0_i32_0 = arith.constant 0 : i32
    %c0_i32_1 = arith.constant 0 : i32
    return %arg0, %arg1, %c0_i32, %c0_i32_0 : i32, i32, i32, i32
  }
}

</mosaic_0001>

<llo_original>
// kernel: tpu_custom_call.1
$region0: #{tpu_custom_call.1}
  #allocation0 [shape = 'u32[]', space=smem, size = 0x4, offset = 0x4, fixed_abs, tag = 'smem constant byte address 0x4 - core index']
  #allocation1 [shape = 'u32[144,128]{1,0:T(1,128)}', space=vmem, size = 0x12000, scoped, tag = 'internal scratch']
  #allocation2 [shape = 'bf16[128,24]{1,0:T(16,128)(2,1)}', space=vmem, size = 0x8000, scoped, tag = 'scratch operand']
  %s0 = inlined_call_operand.vmem [shape: bf16[2,18,18,4], index: 0, kind: input, shape index: {}]
  %s1 = inlined_call_operand.vmem [shape: bf16[2,18,18,4], index: 1, kind: input, shape index: {}]
  %s2 = inlined_call_operand.vmem [shape: bf16[2,18,18,4], index: 2, kind: input, shape index: {}]
  %s3 = inlined_call_operand.vmem [shape: bf16[2,24,16], index: 3, kind: input, shape index: {}]
  %s4 = inlined_call_operand.vmem [shape: f32[1,16], index: 4, kind: input, shape index: {}]
  %s5 = inlined_call_operand.vmem [shape: f32[2,32,16,16], index: 5, kind: output, shape index: {}]
  %s6 = sld [smem:[#allocation0]]
  $region53: #{tpu_custom_call.1} parent=0
    _
  %s8 = ssub.s32 1, %s6
  %s9 = scalar_select 0, %s8, %s6
  loop: start=0, step=1, limit=6
  $region2: #{tpu_custom_call.1} parent=0 // loop_pre_header
    _
  $region3: #{tpu_custom_call.1} parent=0 // loop_header
    %s11 = sphi 0, %s15
    %p12 = scmp.ge.s32.totalorder %s11, 6
    %s18 = sphi 0, %s30
    %s19 = sphi 0, %s26
    %s20 = sphi 0, %s18
    %s21 = sphi 0, %s19
    %s22 = sphi 0, %s20
    %s23 = sphi 0, %s21
    %s35 = sphi 0, %s37
    %s38 = sphi 0, %s35
    %s39 = sphi 0, %s38
    %s55 = sphi 0, %s39
    %s67 = sphi 0, %s69
    %s70 = sphi 0, %s67
    %s71 = sphi 0, %s70
    %s87 = sphi 0, %s71
    %s101 = sphi 0, %s103
    %s104 = sphi 0, %s101
    %s105 = sphi 0, %s104
    %s121 = sphi 0, %s105
    %s125 = sphi 0, %s125
    %s127 = sphi 0, %s125
    %s128 = sphi 0, %s127
    %s142 = sphi 0, %s128
    %s146 = sphi 0, %s146
    %s148 = sphi 0, %s146
    %s149 = sphi 0, %s148
    %s163 = sphi 0, %s149
    %s171 = sphi 0, %s173
    %s174 = sphi 0, %s171
    %s175 = sphi 0, %s174
    %s191 = sphi 0, %s175
  $region4: #{tpu_custom_call.1} parent=0 // loop_header_branch
    %14 = sbr.rel (%p12) target = $region8
  $region5: #{tpu_custom_call.1} parent=0 // loop_body
    %s16 = ssub.s32 %s11, 1
    %s17 = ssub.s32 %s11, 2
    %s24 = sadd.s32 1, %s19
    %p25 = scmp.ge.s32.totalorder %s24, 2
    %s26 = scalar_select %p25, 0, %s24
    %s27 = sadd.s32 1, %s18
    %s28 = scalar_select %p25, %s27, %s18
    %p29 = scmp.ge.s32.totalorder %s28, 2
    %s30 = scalar_select %p29, 0, %s28
    %s31 = ssub.s32 %s18, %s30
    %s32 = ssub.s32 %s19, %s26
    %s33 = sor.u32 %s31, %s32
    %p34 = scmp.eq.s32.totalorder %s33, 0
    %s36 = sadd.s32 %s35, 1
    %s37 = scalar_select %p34, %s35, %s36
    %p40 = pneg %p34
    %p41 = scmp.eq.s32.totalorder %s11, 3
    %p42 = por %p40, %p41
    %p43 = scmp.ne.s32.totalorder %s35, %s38
    %p44 = scmp.eq.s32.totalorder %s11, 0
    %p45 = por %p43, %p44
    %p46 = scmp.ne.s32.totalorder %s35, %s38
    %p47 = scmp.eq.s32.totalorder %s16, 3
    %p48 = por %p46, %p47
    %p49 = scmp.ne.s32.totalorder %s38, %s39
    %p50 = scmp.eq.s32.totalorder %s16, 0
    %p51 = por %p49, %p50
    %p52 = scmp.ne.s32.totalorder %s38, %s39
    %p53 = scmp.eq.s32.totalorder %s17, 3
    %p54 = por %p52, %p53
    %p56 = scmp.ne.s32.totalorder %s39, %s55
    %p57 = scmp.eq.s32.totalorder %s17, 0
    %p58 = por %p56, %p57
    %s59 = sadd.s32 %s19, 1
    %s60 = smul.u32 %s59, 8
    %s61 = sadd.s32 %s26, 1
    %s62 = smul.u32 %s61, 8
    %s63 = ssub.s32 %s18, %s30
    %s64 = ssub.s32 %s60, %s62
    %s65 = sor.u32 %s63, %s64
    %p66 = scmp.eq.s32.totalorder %s65, 0
    %s68 = sadd.s32 %s67, 1
    %s69 = scalar_select %p66, %s67, %s68
    %p72 = pneg %p66
    %p73 = scmp.eq.s32.totalorder %s11, 3
    %p74 = por %p72, %p73
    %p75 = scmp.ne.s32.totalorder %s67, %s70
    %p76 = scmp.eq.s32.totalorder %s11, 0
    %p77 = por %p75, %p76
    %p78 = scmp.ne.s32.totalorder %s67, %s70
    %p79 = scmp.eq.s32.totalorder %s16, 3
    %p80 = por %p78, %p79
    %p81 = scmp.ne.s32.totalorder %s70, %s71
    %p82 = scmp.eq.s32.totalorder %s16, 0
    %p83 = por %p81, %p82
    %p84 = scmp.ne.s32.totalorder %s70, %s71
    %p85 = scmp.eq.s32.totalorder %s17, 3
    %p86 = por %p84, %p85
    %p88 = scmp.ne.s32.totalorder %s71, %s87
    %p89 = scmp.eq.s32.totalorder %s17, 0
    %p90 = por %p88, %p89
    %s91 = sadd.s32 %s19, 1
    %s92 = smul.u32 %s91, 8
    %s93 = sadd.s32 %s92, 1
    %s94 = sadd.s32 %s26, 1
    %s95 = smul.u32 %s94, 8
    %s96 = sadd.s32 %s95, 1
    %s97 = ssub.s32 %s18, %s30
    %s98 = ssub.s32 %s93, %s96
    %s99 = sor.u32 %s97, %s98
    %p100 = scmp.eq.s32.totalorder %s99, 0
    %s102 = sadd.s32 %s101, 1
    %s103 = scalar_select %p100, %s101, %s102
    %p106 = pneg %p100
    %p107 = scmp.eq.s32.totalorder %s11, 3
    %p108 = por %p106, %p107
    %p109 = scmp.ne.s32.totalorder %s101, %s104
    %p110 = scmp.eq.s32.totalorder %s11, 0
    %p111 = por %p109, %p110
    %p112 = scmp.ne.s32.totalorder %s101, %s104
    %p113 = scmp.eq.s32.totalorder %s16, 3
    %p114 = por %p112, %p113
    %p115 = scmp.ne.s32.totalorder %s104, %s105
    %p116 = scmp.eq.s32.totalorder %s16, 0
    %p117 = por %p115, %p116
    %p118 = scmp.ne.s32.totalorder %s104, %s105
    %p119 = scmp.eq.s32.totalorder %s17, 3
    %p120 = por %p118, %p119
    %p122 = scmp.ne.s32.totalorder %s105, %s121
    %p123 = scmp.eq.s32.totalorder %s17, 0
    %p124 = por %p122, %p123
    %s126 = sadd.s32 %s125, 1
    %p129 = scmp.eq.s32.totalorder %s11, 3
    %p130 = scmp.ne.s32.totalorder %s125, %s127
    %p131 = scmp.eq.s32.totalorder %s11, 0
    %p132 = por %p130, %p131
    %p133 = scmp.ne.s32.totalorder %s125, %s127
    %p134 = scmp.eq.s32.totalorder %s16, 3
    %p135 = por %p133, %p134
    %p136 = scmp.ne.s32.totalorder %s127, %s128
    %p137 = scmp.eq.s32.totalorder %s16, 0
    %p138 = por %p136, %p137
    %p139 = scmp.ne.s32.totalorder %s127, %s128
    %p140 = scmp.eq.s32.totalorder %s17, 3
    %p141 = por %p139, %p140
    %p143 = scmp.ne.s32.totalorder %s128, %s142
    %p144 = scmp.eq.s32.totalorder %s17, 0
    %p145 = por %p143, %p144
    %s147 = sadd.s32 %s146, 1
    %p150 = scmp.eq.s32.totalorder %s11, 3
    %p151 = scmp.ne.s32.totalorder %s146, %s148
    %p152 = scmp.eq.s32.totalorder %s11, 0
    %p153 = por %p151, %p152
    %p154 = scmp.ne.s32.totalorder %s146, %s148
    %p155 = scmp.eq.s32.totalorder %s16, 3
    %p156 = por %p154, %p155
    %p157 = scmp.ne.s32.totalorder %s148, %s149
    %p158 = scmp.eq.s32.totalorder %s16, 0
    %p159 = por %p157, %p158
    %p160 = scmp.ne.s32.totalorder %s148, %s149
    %p161 = scmp.eq.s32.totalorder %s17, 3
    %p162 = por %p160, %p161
    %p164 = scmp.ne.s32.totalorder %s149, %s163
    %p165 = scmp.eq.s32.totalorder %s17, 0
    %p166 = por %p164, %p165
    %s167 = ssub.s32 %s18, %s30
    %s168 = ssub.s32 %s19, %s26
    %s169 = sor.u32 %s167, %s168
    %p170 = scmp.eq.s32.totalorder %s169, 0
    %s172 = sadd.s32 %s171, 1
    %s173 = scalar_select %p170, %s171, %s172
    %p176 = pneg %p170
    %p177 = scmp.eq.s32.totalorder %s11, 3
    %p178 = por %p176, %p177
    %p179 = scmp.ne.s32.totalorder %s171, %s174
    %p180 = scmp.eq.s32.totalorder %s11, 0
    %p181 = por %p179, %p180
    %p182 = scmp.ne.s32.totalorder %s171, %s174
    %p183 = scmp.eq.s32.totalorder %s16, 3
    %p184 = por %p182, %p183
    %p185 = scmp.ne.s32.totalorder %s174, %s175
    %p186 = scmp.eq.s32.totalorder %s16, 0
    %p187 = por %p185, %p186
    %p188 = scmp.ne.s32.totalorder %s174, %s175
    %p189 = scmp.eq.s32.totalorder %s17, 3
    %p190 = por %p188, %p189
    %p192 = scmp.ne.s32.totalorder %s175, %s191
    %p193 = scmp.eq.s32.totalorder %s17, 0
    %p194 = por %p192, %p193
    %p195 = scmp.le.s32.totalorder 1, %s11
    %p196 = scmp.lt.s32.totalorder %s11, 5
    %p197 = pnand %p195, %p196
    %p198 = pneg %p197
    // Predicated region
    $region9: #{tpu_custom_call.1} parent=5 // pred_check
      _
    $region10: #{tpu_custom_call.1} parent=5 // pred_check_branch
      %200 = sbr.rel (%p197) target = $region12
    $region11: #{tpu_custom_call.1} parent=5 // pred_region
      %s201 = ssub.s32 %s11, 1
      // Predicated region
      $region13: #{tpu_custom_call.1} parent=11 // pred_check
        %p202 = pneg %p138
      $region14: #{tpu_custom_call.1} parent=11 // pred_check_branch
        %204 = sbr.rel (%p202) target = $region16
      $region15: #{tpu_custom_call.1} parent=11 // pred_region
        _
      $region16: #{tpu_custom_call.1} parent=11 // pred_fallthru
        _
      // Predicated region
      $region17: #{tpu_custom_call.1} parent=11 // pred_check
        %p205 = pneg %p159
      $region18: #{tpu_custom_call.1} parent=11 // pred_check_branch
        %207 = sbr.rel (%p205) target = $region20
      $region19: #{tpu_custom_call.1} parent=11 // pred_region
        _
      $region20: #{tpu_custom_call.1} parent=11 // pred_fallthru
        _
    $region12: #{tpu_custom_call.1} parent=5 // pred_fallthru
      _
    %p208 = scmp.lt.s32.totalorder %s11, 4
    // Predicated region
    $region21: #{tpu_custom_call.1} parent=5 // pred_check
      %p209 = pneg %p208
    $region22: #{tpu_custom_call.1} parent=5 // pred_check_branch
      %211 = sbr.rel (%p209) target = $region24
    $region23: #{tpu_custom_call.1} parent=5 // pred_region
      // Predicated region
      $region25: #{tpu_custom_call.1} parent=23 // pred_check
        %p212 = pneg %p45
      $region26: #{tpu_custom_call.1} parent=23 // pred_check_branch
        %214 = sbr.rel (%p212) target = $region28
      $region27: #{tpu_custom_call.1} parent=23 // pred_region
        %s215 = smul.u32 8, %s19
        %s216 = ssub.s32 18, %s215
        %p217 = scmp.lt.s32.totalorder %s216, 8
        %s218 = scalar_select %p217, %s216, 8
        %s219 = smul.u32 64, %s218
        %s220 = smul.u32 %s219, 3
        %p221 = scmp.lt.s32.totalorder %s18, 1
        %s222 = scalar_select %p221, %s18, 1
        %p223 = scmp.lt.s32.totalorder %s215, 17
        %s224 = scalar_select %p223, %s215, 17
        %s225 = smul.addr %s224, 3
        %s226 = smul.addr %s222, 54
        %s227 = sadd.s32 %s225, %s226
        %s228 = smul.addr %s227, 4
        %s229 = scalar_lea.vmem %s0, %s228
        %s230 = smul.u32 8, %s19
        %s231 = ssub.s32 18, %s230
        %p232 = scmp.lt.s32.totalorder %s231, 8
        %s233 = scalar_select %p232, %s231, 8
        %s234 = smul.u32 64, %s233
        %s235 = smul.u32 %s234, 3
      $region28: #{tpu_custom_call.1} parent=23 // pred_fallthru
        _
      // Predicated region
      $region29: #{tpu_custom_call.1} parent=23 // pred_check
        %p236 = pneg %p77
      $region30: #{tpu_custom_call.1} parent=23 // pred_check_branch
        %238 = sbr.rel (%p236) target = $region32
      $region31: #{tpu_custom_call.1} parent=23 // pred_region
        %s239 = sadd.s32 %s19, 1
        %s240 = smul.u32 %s239, 8
        %p241 = scmp.lt.s32.totalorder %s18, 1
        %s242 = scalar_select %p241, %s18, 1
        %p243 = scmp.lt.s32.totalorder %s240, 17
        %s244 = scalar_select %p243, %s240, 17
        %s245 = smul.addr %s244, 3
        %s246 = smul.addr %s242, 54
        %s247 = sadd.s32 %s245, %s246
        %s248 = smul.addr %s247, 4
        %s249 = scalar_lea.vmem %s1, %s248
        %s250 = sadd.s32 %s19, 1
        %s251 = smul.u32 %s250, 8
      $region32: #{tpu_custom_call.1} parent=23 // pred_fallthru
        _
      // Predicated region
      $region33: #{tpu_custom_call.1} parent=23 // pred_check
        %p252 = pneg %p111
      $region34: #{tpu_custom_call.1} parent=23 // pred_check_branch
        %254 = sbr.rel (%p252) target = $region36
      $region35: #{tpu_custom_call.1} parent=23 // pred_region
        %s255 = sadd.s32 %s19, 1
        %s256 = smul.u32 %s255, 8
        %s257 = sadd.s32 %s256, 1
        %p258 = scmp.lt.s32.totalorder %s18, 1
        %s259 = scalar_select %p258, %s18, 1
        %p260 = scmp.lt.s32.totalorder %s257, 17
        %s261 = scalar_select %p260, %s257, 17
        %s262 = smul.addr %s261, 3
        %s263 = smul.addr %s259, 54
        %s264 = sadd.s32 %s262, %s263
        %s265 = smul.addr %s264, 4
        %s266 = scalar_lea.vmem %s2, %s265
        %s267 = sadd.s32 %s19, 1
        %s268 = smul.u32 %s267, 8
        %s269 = sadd.s32 %s268, 1
      $region36: #{tpu_custom_call.1} parent=23 // pred_fallthru
        _
    $region24: #{tpu_custom_call.1} parent=5 // pred_fallthru
      _
    %p270 = scmp.le.s32.totalorder 1, %s11
    %p271 = scmp.lt.s32.totalorder %s11, 5
    %p272 = pnand %p270, %p271
    %p273 = pneg %p272
    // Predicated region
    $region37: #{tpu_custom_call.1} parent=5 // pred_check
      _
    $region38: #{tpu_custom_call.1} parent=5 // pred_check_branch
      %275 = sbr.rel (%p272) target = $region40
    $region39: #{tpu_custom_call.1} parent=5 // pred_region
      %s276 = ssub.s32 %s11, 1
      %s277 = smul.u32 8, %s21
      %s278 = ssub.s32 18, %s277
      %p279 = scmp.lt.s32.totalorder %s278, 8
      %s280 = scalar_select %p279, %s278, 8
      %s281 = smul.u32 64, %s280
      %s282 = smul.u32 %s281, 3
      %p283 = scmp.lt.s32.totalorder %s20, 1
      %s284 = scalar_select %p283, %s20, 1
      %p285 = scmp.lt.s32.totalorder %s277, 17
      %s286 = scalar_select %p285, %s277, 17
      %s287 = smul.addr %s286, 3
      %s288 = smul.addr %s284, 54
      %s289 = sadd.s32 %s287, %s288
      %s290 = smul.addr %s289, 4
      %s291 = scalar_lea.vmem %s0, %s290
      %p292 = pneg %p51
      %p293 = pneg %p48
      %s294 = sadd.s32 %s21, 1
      %s295 = smul.u32 %s294, 8
      %p296 = scmp.lt.s32.totalorder %s20, 1
      %s297 = scalar_select %p296, %s20, 1
      %p298 = scmp.lt.s32.totalorder %s295, 17
      %s299 = scalar_select %p298, %s295, 17
      %s300 = smul.addr %s299, 3
      %s301 = smul.addr %s297, 54
      %s302 = sadd.s32 %s300, %s301
      %s303 = smul.addr %s302, 4
      %s304 = scalar_lea.vmem %s1, %s303
      %p305 = pneg %p83
      %p306 = pneg %p80
      %s307 = sadd.s32 %s21, 1
      %s308 = smul.u32 %s307, 8
      %s309 = sadd.s32 %s308, 1
      %p310 = scmp.lt.s32.totalorder %s20, 1
      %s311 = scalar_select %p310, %s20, 1
      %p312 = scmp.lt.s32.totalorder %s309, 17
      %s313 = scalar_select %p312, %s309, 17
      %s314 = smul.addr %s313, 3
      %s315 = smul.addr %s311, 54
      %s316 = sadd.s32 %s314, %s315
      %s317 = smul.addr %s316, 4
      %s318 = scalar_lea.vmem %s2, %s317
      %p319 = pneg %p117
      %p320 = pneg %p114
      %p321 = pneg %p138
      %p322 = pneg %p135
      %p323 = pneg %p159
      %p324 = pneg %p156
      %p325 = pneg %p187
      %p326 = pneg %p184
      %s327 = smul.u32 16, %s21
      %p328 = scmp.lt.s32.totalorder %s20, 1
      %s329 = scalar_select %p328, %s20, 1
      %p330 = scmp.lt.s32.totalorder %s327, 31
      %s331 = scalar_select %p330, %s327, 31
      %s332 = smul.addr %s331, 2
      %s333 = smul.addr %s329, 64
      %s334 = sadd.s32 %s332, %s333
      %s335 = smul.addr %s334, 8
      %s336 = scalar_lea.vmem %s5, %s335
      %s337 = smul.u32 8, %s21
      %s338 = ssub.s32 18, %s337
      %p339 = scmp.lt.s32.totalorder %s338, 8
      %s340 = scalar_select %p339, %s338, 8
      %s341 = smul.u32 64, %s340
      %s342 = smul.u32 %s341, 3
      %p343 = scmp.lt.s32.totalorder %s20, 1
      %s344 = scalar_select %p343, %s20, 1
      %p345 = scmp.lt.s32.totalorder %s337, 17
      %s346 = scalar_select %p345, %s337, 17
      %s347 = smul.addr %s346, 3
      %s348 = smul.addr %s344, 54
      %s349 = sadd.s32 %s347, %s348
      %s350 = smul.addr %s349, 4
      %s351 = scalar_lea.vmem %s0, %s350
      %s352 = smul.u32 8, %s21
      %s353 = ssub.s32 18, %s352
      %p354 = scmp.lt.s32.totalorder %s353, 8
      %s355 = scalar_select %p354, %s353, 8
      %s356 = smul.u32 64, %s355
      %s357 = smul.u32 %s356, 3
      %s358 = sadd.s32 %s21, 1
      %s359 = smul.u32 %s358, 8
      %p360 = scmp.lt.s32.totalorder %s20, 1
      %s361 = scalar_select %p360, %s20, 1
      %p362 = scmp.lt.s32.totalorder %s359, 17
      %s363 = scalar_select %p362, %s359, 17
      %s364 = smul.addr %s363, 3
      %s365 = smul.addr %s361, 54
      %s366 = sadd.s32 %s364, %s365
      %s367 = smul.addr %s366, 4
      %s368 = scalar_lea.vmem %s1, %s367
      %s369 = sadd.s32 %s21, 1
      %s370 = smul.u32 %s369, 8
      %s371 = sadd.s32 %s21, 1
      %s372 = smul.u32 %s371, 8
      %s373 = sadd.s32 %s372, 1
      %p374 = scmp.lt.s32.totalorder %s20, 1
      %s375 = scalar_select %p374, %s20, 1
      %p376 = scmp.lt.s32.totalorder %s373, 17
      %s377 = scalar_select %p376, %s373, 17
      %s378 = smul.addr %s377, 3
      %s379 = smul.addr %s375, 54
      %s380 = sadd.s32 %s378, %s379
      %s381 = smul.addr %s380, 4
      %s382 = scalar_lea.vmem %s2, %s381
      %s383 = sadd.s32 %s21, 1
      %s384 = smul.u32 %s383, 8
      %s385 = sadd.s32 %s384, 1
      %s386 = smul.u32 16, %s21
      %p387 = scmp.lt.s32.totalorder %s20, 1
      %s388 = scalar_select %p387, %s20, 1
      %p389 = scmp.lt.s32.totalorder %s386, 31
      %s390 = scalar_select %p389, %s386, 31
      %s391 = smul.addr %s390, 2
      %s392 = smul.addr %s388, 64
      %s393 = sadd.s32 %s391, %s392
      %s394 = smul.addr %s393, 8
      %s395 = scalar_lea.vmem %s5, %s394
      %s396 = smul.u32 16, %s21
      %v398 = vld [vmem:[%s4] sm:$0x1]
      %v399 = vld [vmem:[%s351] sm:$0xf]
      %v400 = vld [vmem:[%s351 + $0x4] sm:$0xf]
      %v401 = vld [vmem:[%s351 + $0x8] sm:$0x1]
      %s402 = scalar_lea.vmem %s351, 12
      %v403 = vld [vmem:[%s402] sm:$0xf]
      %v404 = vld [vmem:[%s402 + $0x4] sm:$0xf]
      %v405 = vld [vmem:[%s402 + $0x8] sm:$0x1]
      %s406 = scalar_lea.vmem %s351, 24
      %v407 = vld [vmem:[%s406] sm:$0xf]
      %v408 = vld [vmem:[%s406 + $0x4] sm:$0xf]
      %v409 = vld [vmem:[%s406 + $0x8] sm:$0x1]
      %s410 = scalar_lea.vmem %s351, 36
      %v411 = vld [vmem:[%s410] sm:$0xf]
      %v412 = vld [vmem:[%s410 + $0x4] sm:$0xf]
      %v413 = vld [vmem:[%s410 + $0x8] sm:$0x1]
      %s414 = scalar_lea.vmem %s351, 48
      %v415 = vld [vmem:[%s414] sm:$0xf]
      %v416 = vld [vmem:[%s414 + $0x4] sm:$0xf]
      %v417 = vld [vmem:[%s414 + $0x8] sm:$0x1]
      %s418 = scalar_lea.vmem %s351, 60
      %v419 = vld [vmem:[%s418] sm:$0xf]
      %v420 = vld [vmem:[%s418 + $0x4] sm:$0xf]
      %v421 = vld [vmem:[%s418 + $0x8] sm:$0x1]
      %s422 = scalar_lea.vmem %s351, 72
      %v423 = vld [vmem:[%s422] sm:$0xf]
      %v424 = vld [vmem:[%s422 + $0x4] sm:$0xf]
      %v425 = vld [vmem:[%s422 + $0x8] sm:$0x1]
      %s426 = scalar_lea.vmem %s351, 84
      %v427 = vld [vmem:[%s426] sm:$0xf]
      %v428 = vld [vmem:[%s426 + $0x4] sm:$0xf]
      %v429 = vld [vmem:[%s426 + $0x8] sm:$0x1]
      %v430 = vld [vmem:[%s368] sm:$0xf]
      %v431 = vld [vmem:[%s368 + $0x4] sm:$0xf]
      %v432 = vld [vmem:[%s368 + $0x8] sm:$0x1]
      %v433 = vld [vmem:[%s382] sm:$0xf]
      %v434 = vld [vmem:[%s382 + $0x4] sm:$0xf]
      %v435 = vld [vmem:[%s382 + $0x8] sm:$0x1]
      %v438 = vunpack.c.l.b16 %v399
      %v439 = vunpack.c.l.b16 %v400
      %v440 = vpack.c.b16 %v439, %v438
      %v442 = vunpack.c.l.b16 %v401
      %v443 = vpack.c.b16 %v442, %v442
      %vm444 = vsmask.f32 7424
      %v446 = vshrl.u32 %v440, 16
      %v448 = vshll.u32 %v440, 16
      %v450 = vrot.slane %v448, 1
      %v451 = vor.u32 %v446, %v450
      %v453 = vshll.u32 %v443, 16
      %v455 = vrot.slane %v453, 1
      %v456 = vsel %vm444, %v451, %v455
      %457 = vrot.lane.b32.xlu0 %v456, 4
      %v458 = vpop.permute.xlu0 %457
      %vm459 = vcmask 1046528
      %v460 = vrot.slane %v440, 1
      %v461 = vrot.slane %v443, 1
      %v462 = vsel %vm459, %v460, %v461
      %463 = vrot.lane.b32.xlu0 %v462, 8
      %v464 = vpop.permute.xlu0 %463
      %v467 = vunpack.c.l.b16 %v403
      %v468 = vunpack.c.l.b16 %v404
      %v469 = vpack.c.b16 %v468, %v467
      %470 = vrot.lane.b32.xlu0 %v469, 12
      %v471 = vpop.permute.xlu0 %470
      %v473 = vunpack.c.l.b16 %v405
      %v474 = vpack.c.b16 %v473, %v473
      %v476 = vshrl.u32 %v469, 16
      %v478 = vshll.u32 %v469, 16
      %v480 = vrot.slane %v478, 1
      %v481 = vor.u32 %v476, %v480
      %v483 = vshll.u32 %v474, 16
      %v485 = vrot.slane %v483, 1
      %v486 = vsel %vm444, %v481, %v485
      %487 = vrot.lane.b32.xlu0 %v486, 16
      %v488 = vpop.permute.xlu0 %487
      %v489 = vrot.slane %v469, 1
      %v490 = vrot.slane %v474, 1
      %v491 = vsel %vm459, %v489, %v490
      %492 = vrot.lane.b32.xlu0 %v491, 20
      %v493 = vpop.permute.xlu0 %492
      %vm494 = vcmask 31744
      %v496 = vsel %vm494, %v440, %v458
      %vm497 = vcmask 64512
      %v499 = vsel %vm497, %v496, %v464
      %vm500 = vcmask 97280
      %v502 = vsel %vm500, %v499, %v471
      %vm503 = vcmask 130048
      %v505 = vsel %vm503, %v502, %v488
      %vm506 = vcmask 162816
      %v508 = vsel %vm506, %v505, %v493
      %vm510 = vcmask 195584
      %511 = vst.msk [vmem:[#allocation2] sm:$0xff] %vm510, %v508
      %512 = vrot.lane.b32.xlu0 %v486, 4
      %v513 = vpop.permute.xlu0 %512
      %514 = vrot.lane.b32.xlu0 %v491, 8
      %v515 = vpop.permute.xlu0 %514
      %v518 = vunpack.c.l.b16 %v407
      %v519 = vunpack.c.l.b16 %v408
      %v520 = vpack.c.b16 %v519, %v518
      %521 = vrot.lane.b32.xlu0 %v520, 12
      %v522 = vpop.permute.xlu0 %521
      %v524 = vunpack.c.l.b16 %v409
      %v525 = vpack.c.b16 %v524, %v524
      %v527 = vshrl.u32 %v520, 16
      %v529 = vshll.u32 %v520, 16
      %v531 = vrot.slane %v529, 1
      %v532 = vor.u32 %v527, %v531
      %v534 = vshll.u32 %v525, 16
      %v536 = vrot.slane %v534, 1
      %v537 = vsel %vm444, %v532, %v536
      %538 = vrot.lane.b32.xlu0 %v537, 16
      %v539 = vpop.permute.xlu0 %538
      %v540 = vrot.slane %v520, 1
      %v541 = vrot.slane %v525, 1
      %v542 = vsel %vm459, %v540, %v541
      %543 = vrot.lane.b32.xlu0 %v542, 20
      %v544 = vpop.permute.xlu0 %543
      %v546 = vsel %vm494, %v469, %v513
      %v548 = vsel %vm497, %v546, %v515
      %v550 = vsel %vm500, %v548, %v522
      %v552 = vsel %vm503, %v550, %v539
      %v554 = vsel %vm506, %v552, %v544
      %556 = vst.msk [vmem:[#allocation2 + $0x8] sm:$0xff] %vm510, %v554
      %557 = vrot.lane.b32.xlu0 %v537, 4
      %v558 = vpop.permute.xlu0 %557
      %559 = vrot.lane.b32.xlu0 %v542, 8
      %v560 = vpop.permute.xlu0 %559
      %v563 = vunpack.c.l.b16 %v411
      %v564 = vunpack.c.l.b16 %v412
      %v565 = vpack.c.b16 %v564, %v563
      %566 = vrot.lane.b32.xlu0 %v565, 12
      %v567 = vpop.permute.xlu0 %566
      %v569 = vunpack.c.l.b16 %v413
      %v570 = vpack.c.b16 %v569, %v569
      %v572 = vshrl.u32 %v565, 16
      %v574 = vshll.u32 %v565, 16
      %v576 = vrot.slane %v574, 1
      %v577 = vor.u32 %v572, %v576
      %v579 = vshll.u32 %v570, 16
      %v581 = vrot.slane %v579, 1
      %v582 = vsel %vm444, %v577, %v581
      %583 = vrot.lane.b32.xlu0 %v582, 16
      %v584 = vpop.permute.xlu0 %583
      %v585 = vrot.slane %v565, 1
      %v586 = vrot.slane %v570, 1
      %v587 = vsel %vm459, %v585, %v586
      %588 = vrot.lane.b32.xlu0 %v587, 20
      %v589 = vpop.permute.xlu0 %588
      %v591 = vsel %vm494, %v520, %v558
      %v593 = vsel %vm497, %v591, %v560
      %v595 = vsel %vm500, %v593, %v567
      %v597 = vsel %vm503, %v595, %v584
      %v599 = vsel %vm506, %v597, %v589
      %601 = vst.msk [vmem:[#allocation2 + $0x10] sm:$0xff] %vm510, %v599
      %602 = vrot.lane.b32.xlu0 %v582, 4
      %v603 = vpop.permute.xlu0 %602
      %604 = vrot.lane.b32.xlu0 %v587, 8
      %v605 = vpop.permute.xlu0 %604
      %v608 = vunpack.c.l.b16 %v415
      %v609 = vunpack.c.l.b16 %v416
      %v610 = vpack.c.b16 %v609, %v608
      %611 = vrot.lane.b32.xlu0 %v610, 12
      %v612 = vpop.permute.xlu0 %611
      %v614 = vunpack.c.l.b16 %v417
      %v615 = vpack.c.b16 %v614, %v614
      %v617 = vshrl.u32 %v610, 16
      %v619 = vshll.u32 %v610, 16
      %v621 = vrot.slane %v619, 1
      %v622 = vor.u32 %v617, %v621
      %v624 = vshll.u32 %v615, 16
      %v626 = vrot.slane %v624, 1
      %v627 = vsel %vm444, %v622, %v626
      %628 = vrot.lane.b32.xlu0 %v627, 16
      %v629 = vpop.permute.xlu0 %628
      %v630 = vrot.slane %v610, 1
      %v631 = vrot.slane %v615, 1
      %v632 = vsel %vm459, %v630, %v631
      %633 = vrot.lane.b32.xlu0 %v632, 20
      %v634 = vpop.permute.xlu0 %633
      %v636 = vsel %vm494, %v565, %v603
      %v638 = vsel %vm497, %v636, %v605
      %v640 = vsel %vm500, %v638, %v612
      %v642 = vsel %vm503, %v640, %v629
      %v644 = vsel %vm506, %v642, %v634
      %646 = vst.msk [vmem:[#allocation2 + $0x18] sm:$0xff] %vm510, %v644
      %647 = vrot.lane.b32.xlu0 %v627, 4
      %v648 = vpop.permute.xlu0 %647
      %649 = vrot.lane.b32.xlu0 %v632, 8
      %v650 = vpop.permute.xlu0 %649
      %v653 = vunpack.c.l.b16 %v419
      %v654 = vunpack.c.l.b16 %v420
      %v655 = vpack.c.b16 %v654, %v653
      %656 = vrot.lane.b32.xlu0 %v655, 12
      %v657 = vpop.permute.xlu0 %656
      %v659 = vunpack.c.l.b16 %v421
      %v660 = vpack.c.b16 %v659, %v659
      %v662 = vshrl.u32 %v655, 16
      %v664 = vshll.u32 %v655, 16
      %v666 = vrot.slane %v664, 1
      %v667 = vor.u32 %v662, %v666
      %v669 = vshll.u32 %v660, 16
      %v671 = vrot.slane %v669, 1
      %v672 = vsel %vm444, %v667, %v671
      %673 = vrot.lane.b32.xlu0 %v672, 16
      %v674 = vpop.permute.xlu0 %673
      %v675 = vrot.slane %v655, 1
      %v676 = vrot.slane %v660, 1
      %v677 = vsel %vm459, %v675, %v676
      %678 = vrot.lane.b32.xlu0 %v677, 20
      %v679 = vpop.permute.xlu0 %678
      %v681 = vsel %vm494, %v610, %v648
      %v683 = vsel %vm497, %v681, %v650
      %v685 = vsel %vm500, %v683, %v657
      %v687 = vsel %vm503, %v685, %v674
      %v689 = vsel %vm506, %v687, %v679
      %691 = vst.msk [vmem:[#allocation2 + $0x20] sm:$0xff] %vm510, %v689
      %692 = vrot.lane.b32.xlu0 %v672, 4
      %v693 = vpop.permute.xlu0 %692
      %694 = vrot.lane.b32.xlu0 %v677, 8
      %v695 = vpop.permute.xlu0 %694
      %v698 = vunpack.c.l.b16 %v423
      %v699 = vunpack.c.l.b16 %v424
      %v700 = vpack.c.b16 %v699, %v698
      %701 = vrot.lane.b32.xlu0 %v700, 12
      %v702 = vpop.permute.xlu0 %701
      %v704 = vunpack.c.l.b16 %v425
      %v705 = vpack.c.b16 %v704, %v704
      %v707 = vshrl.u32 %v700, 16
      %v709 = vshll.u32 %v700, 16
      %v711 = vrot.slane %v709, 1
      %v712 = vor.u32 %v707, %v711
      %v714 = vshll.u32 %v705, 16
      %v716 = vrot.slane %v714, 1
      %v717 = vsel %vm444, %v712, %v716
      %718 = vrot.lane.b32.xlu0 %v717, 16
      %v719 = vpop.permute.xlu0 %718
      %v720 = vrot.slane %v700, 1
      %v721 = vrot.slane %v705, 1
      %v722 = vsel %vm459, %v720, %v721
      %723 = vrot.lane.b32.xlu0 %v722, 20
      %v724 = vpop.permute.xlu0 %723
      %v726 = vsel %vm494, %v655, %v693
      %v728 = vsel %vm497, %v726, %v695
      %v730 = vsel %vm500, %v728, %v702
      %v732 = vsel %vm503, %v730, %v719
      %v734 = vsel %vm506, %v732, %v724
      %736 = vst.msk [vmem:[#allocation2 + $0x28] sm:$0xff] %vm510, %v734
      %737 = vrot.lane.b32.xlu0 %v717, 4
      %v738 = vpop.permute.xlu0 %737
      %739 = vrot.lane.b32.xlu0 %v722, 8
      %v740 = vpop.permute.xlu0 %739
      %v743 = vunpack.c.l.b16 %v427
      %v744 = vunpack.c.l.b16 %v428
      %v745 = vpack.c.b16 %v744, %v743
      %746 = vrot.lane.b32.xlu0 %v745, 12
      %v747 = vpop.permute.xlu0 %746
      %v749 = vunpack.c.l.b16 %v429
      %v750 = vpack.c.b16 %v749, %v749
      %v752 = vshrl.u32 %v745, 16
      %v754 = vshll.u32 %v745, 16
      %v756 = vrot.slane %v754, 1
      %v757 = vor.u32 %v752, %v756
      %v759 = vshll.u32 %v750, 16
      %v761 = vrot.slane %v759, 1
      %v762 = vsel %vm444, %v757, %v761
      %763 = vrot.lane.b32.xlu0 %v762, 16
      %v764 = vpop.permute.xlu0 %763
      %v765 = vrot.slane %v745, 1
      %v766 = vrot.slane %v750, 1
      %v767 = vsel %vm459, %v765, %v766
      %768 = vrot.lane.b32.xlu0 %v767, 20
      %v769 = vpop.permute.xlu0 %768
      %v771 = vsel %vm494, %v700, %v738
      %v773 = vsel %vm497, %v771, %v740
      %v775 = vsel %vm500, %v773, %v747
      %v777 = vsel %vm503, %v775, %v764
      %v779 = vsel %vm506, %v777, %v769
      %781 = vst.msk [vmem:[#allocation2 + $0x30] sm:$0xff] %vm510, %v779
      %782 = vrot.lane.b32.xlu0 %v762, 4
      %v783 = vpop.permute.xlu0 %782
      %784 = vrot.lane.b32.xlu0 %v767, 8
      %v785 = vpop.permute.xlu0 %784
      %v788 = vunpack.c.l.b16 %v430
      %v789 = vunpack.c.l.b16 %v431
      %v790 = vpack.c.b16 %v789, %v788
      %791 = vrot.lane.b32.xlu0 %v790, 12
      %v792 = vpop.permute.xlu0 %791
      %v794 = vunpack.c.l.b16 %v432
      %v795 = vpack.c.b16 %v794, %v794
      %v797 = vshrl.u32 %v790, 16
      %v799 = vshll.u32 %v790, 16
      %v801 = vrot.slane %v799, 1
      %v802 = vor.u32 %v797, %v801
      %v804 = vshll.u32 %v795, 16
      %v806 = vrot.slane %v804, 1
      %v807 = vsel %vm444, %v802, %v806
      %808 = vrot.lane.b32.xlu0 %v807, 16
      %v809 = vpop.permute.xlu0 %808
      %v810 = vrot.slane %v790, 1
      %v811 = vrot.slane %v795, 1
      %v812 = vsel %vm459, %v810, %v811
      %813 = vrot.lane.b32.xlu0 %v812, 20
      %v814 = vpop.permute.xlu0 %813
      %v816 = vsel %vm494, %v745, %v783
      %v818 = vsel %vm497, %v816, %v785
      %v820 = vsel %vm500, %v818, %v792
      %v822 = vsel %vm503, %v820, %v809
      %v824 = vsel %vm506, %v822, %v814
      %826 = vst.msk [vmem:[#allocation2 + $0x38] sm:$0xff] %vm510, %v824
      %v827 = vld [vmem:[#allocation2] sm:$0xff]
      %v828 = vld [vmem:[#allocation2 + $0x8] sm:$0xff]
      %v829 = vld [vmem:[#allocation2 + $0x10] sm:$0xff]
      %v830 = vld [vmem:[#allocation2 + $0x18] sm:$0xff]
      %v831 = vld [vmem:[#allocation2 + $0x20] sm:$0xff]
      %v832 = vld [vmem:[#allocation2 + $0x28] sm:$0xff]
      %v833 = vld [vmem:[#allocation2 + $0x30] sm:$0xff]
      %v834 = vld [vmem:[#allocation2 + $0x38] sm:$0xff]
      %v835 = vld [vmem:[%s3] sm:$0xf]
      %v836 = vld [vmem:[%s3 + $0x4] sm:$0xf]
      %v837 = vld [vmem:[%s3 + $0x8] sm:$0xf]
      %v839 = vlaneseq
      %v840 = vshrl.u32 %v839, 7
      %v841 = vsub.s32 0, %v840
      %v842 = vrot.slane %v398, %v841
      %v847 = vunpack.c.l.b16 %v835
      %v848 = vunpack.c.l.b16 %v836
      %v849 = vunpack.c.l.b16 %v837
      %v850 = vpack.c.b16 %v848, %v847
      %v851 = vpack.c.b16 %v849, %v849
      %v854 = vsel %vm510, %v827, 0
      %v857 = vsel %vm510, %v828, 0
      %v860 = vsel %vm510, %v829, 0
      %v863 = vsel %vm510, %v830, 0
      %v866 = vsel %vm510, %v831, 0
      %v869 = vsel %vm510, %v832, 0
      %v872 = vsel %vm510, %v833, 0
      %v875 = vsel %vm510, %v834, 0
      %vm877 = vcmask 1043456
      %v879 = vsel %vm877, %v851, 0
      %881 = vmatprep.subr.bf16.mxu0 0
      %882 = vmatpush1.bf16.msra.mxu0 %v850
      %883 = vmatprep.subr.bf16.mxu0 0
      %884 = vmatpush1.bf16.msra.mxu0 %v879
      %885 = vmatprep.subr.bf16.mxu0 0
      %886 = vmatpush1.bf16.msra.mxu0 0
      %887 = vmatprep.subr.bf16.mxu0 0
      %888 = vmatpush1.bf16.msra.mxu0 0
      %889 = vmatprep.subr.bf16.mxu0 0
      %890 = vmatpush1.bf16.msra.mxu0 0
      %891 = vmatprep.subr.bf16.mxu0 0
      %892 = vmatpush1.bf16.msra.mxu0 0
      %893 = vmatprep.subr.bf16.mxu0 0
      %894 = vmatpush1.bf16.msra.mxu0 0
      %895 = vmatprep.subr.bf16.mxu0 0
      %896 = vmatpush1.bf16.msra.mxu0 0
      %897 = vmatprep.subr.bf16.mxu0 0
      %898 = vmatpush1.bf16.msra.mxu0 0
      %899 = vmatprep.subr.bf16.mxu0 0
      %900 = vmatpush1.bf16.msra.mxu0 0
      %901 = vmatprep.subr.bf16.mxu0 0
      %902 = vmatpush1.bf16.msra.mxu0 0
      %903 = vmatprep.subr.bf16.mxu0 0
      %904 = vmatpush1.bf16.msra.mxu0 0
      %905 = vmatprep.subr.bf16.mxu0 0
      %906 = vmatpush1.bf16.msra.mxu0 0
      %907 = vmatprep.subr.bf16.mxu0 0
      %908 = vmatpush1.bf16.msra.mxu0 0
      %909 = vmatprep.subr.bf16.mxu0 0
      %910 = vmatpush1.bf16.msra.mxu0 0
      %911 = vmatprep.subr.bf16.mxu0 0
      %912 = vmatpush1.bf16.msra.mxu0 0
      %913 = vmatprep.mubr.bf16.mxu0 0
      %914 = vmatmul.mubr.bf16.gmra.mrb[0].mxu0 %v854
      %v915 = vpop.f32.mrb[0].mxu0
      %v916 = vadd.f32 %v842, %v915
      %v917 = vpop.f32.mrb[0].mxu0
      %v918 = vpop.f32.mrb[0].mxu0
      %v919 = vadd.f32 %v842, %v918
      %v920 = vpop.f32.mrb[0].mxu0
      %921 = vmatprep.mubr.bf16.mxu0 0
      %922 = vmatmul.mubr.bf16.gmra.mrb[0].mxu0 %v857
      %v923 = vpop.f32.mrb[0].mxu0
      %v924 = vadd.f32 %v842, %v923
      %v925 = vpop.f32.mrb[0].mxu0
      %v926 = vpop.f32.mrb[0].mxu0
      %v927 = vadd.f32 %v842, %v926
      %v928 = vpop.f32.mrb[0].mxu0
      %929 = vmatprep.mubr.bf16.mxu0 0
      %930 = vmatmul.mubr.bf16.gmra.mrb[0].mxu0 %v860
      %v931 = vpop.f32.mrb[0].mxu0
      %v932 = vadd.f32 %v842, %v931
      %v933 = vpop.f32.mrb[0].mxu0
      %v934 = vpop.f32.mrb[0].mxu0
      %v935 = vadd.f32 %v842, %v934
      %v936 = vpop.f32.mrb[0].mxu0
      %937 = vmatprep.mubr.bf16.mxu0 0
      %938 = vmatmul.mubr.bf16.gmra.mrb[0].mxu0 %v863
      %v939 = vpop.f32.mrb[0].mxu0
      %v940 = vadd.f32 %v842, %v939
      %v941 = vpop.f32.mrb[0].mxu0
      %v942 = vpop.f32.mrb[0].mxu0
      %v943 = vadd.f32 %v842, %v942
      %v944 = vpop.f32.mrb[0].mxu0
      %945 = vmatprep.mubr.bf16.mxu0 0
      %946 = vmatmul.mubr.bf16.gmra.mrb[0].mxu0 %v866
      %v947 = vpop.f32.mrb[0].mxu0
      %v948 = vadd.f32 %v842, %v947
      %v949 = vpop.f32.mrb[0].mxu0
      %v950 = vpop.f32.mrb[0].mxu0
      %v951 = vadd.f32 %v842, %v950
      %v952 = vpop.f32.mrb[0].mxu0
      %953 = vmatprep.mubr.bf16.mxu0 0
      %954 = vmatmul.mubr.bf16.gmra.mrb[0].mxu0 %v869
      %v955 = vpop.f32.mrb[0].mxu0
      %v956 = vadd.f32 %v842, %v955
      %v957 = vpop.f32.mrb[0].mxu0
      %v958 = vpop.f32.mrb[0].mxu0
      %v959 = vadd.f32 %v842, %v958
      %v960 = vpop.f32.mrb[0].mxu0
      %961 = vmatprep.mubr.bf16.mxu0 0
      %962 = vmatmul.mubr.bf16.gmra.mrb[0].mxu0 %v872
      %v963 = vpop.f32.mrb[0].mxu0
      %v964 = vadd.f32 %v842, %v963
      %v965 = vpop.f32.mrb[0].mxu0
      %v966 = vpop.f32.mrb[0].mxu0
      %v967 = vadd.f32 %v842, %v966
      %v968 = vpop.f32.mrb[0].mxu0
      %969 = vmatprep.mubr.bf16.mxu0 0
      %970 = vmatmul.mubr.bf16.gmra.mrb[0].mxu0 %v875
      %v971 = vpop.f32.mrb[0].mxu0
      %v972 = vadd.f32 %v842, %v971
      %v973 = vpop.f32.mrb[0].mxu0
      %v974 = vpop.f32.mrb[0].mxu0
      %v975 = vadd.f32 %v842, %v974
      %v976 = vpop.f32.mrb[0].mxu0
      %977 = vdwg.mxu0
      %978 = vst.msk [vmem:[%s395] sm:$0xff] %vm503, %v916
      %979 = vst.msk [vmem:[%s395 + $0x8] sm:$0xff] %vm503, %v919
      %s980 = scalar_lea.vmem %s395, 32
      %981 = vst.msk [vmem:[%s980] sm:$0xff] %vm503, %v924
      %982 = vst.msk [vmem:[%s980 + $0x8] sm:$0xff] %vm503, %v927
      %s983 = scalar_lea.vmem %s395, 64
      %984 = vst.msk [vmem:[%s983] sm:$0xff] %vm503, %v932
      %985 = vst.msk [vmem:[%s983 + $0x8] sm:$0xff] %vm503, %v935
      %s986 = scalar_lea.vmem %s395, 96
      %987 = vst.msk [vmem:[%s986] sm:$0xff] %vm503, %v940
      %988 = vst.msk [vmem:[%s986 + $0x8] sm:$0xff] %vm503, %v943
      %s989 = scalar_lea.vmem %s395, 128
      %990 = vst.msk [vmem:[%s989] sm:$0xff] %vm503, %v948
      %991 = vst.msk [vmem:[%s989 + $0x8] sm:$0xff] %vm503, %v951
      %s992 = scalar_lea.vmem %s395, 160
      %993 = vst.msk [vmem:[%s992] sm:$0xff] %vm503, %v956
      %994 = vst.msk [vmem:[%s992 + $0x8] sm:$0xff] %vm503, %v959
      %s995 = scalar_lea.vmem %s395, 192
      %996 = vst.msk [vmem:[%s995] sm:$0xff] %vm503, %v964
      %997 = vst.msk [vmem:[%s995 + $0x8] sm:$0xff] %vm503, %v967
      %s998 = scalar_lea.vmem %s395, 224
      %999 = vst.msk [vmem:[%s998] sm:$0xff] %vm503, %v972
      %1000 = vst.msk [vmem:[%s998 + $0x8] sm:$0xff] %vm503, %v975
      %1001 = vst.msk [vmem:[#allocation2] sm:$0xff] %vm510, %v554
      %1002 = vst.msk [vmem:[#allocation2 + $0x8] sm:$0xff] %vm510, %v599
      %1003 = vst.msk [vmem:[#allocation2 + $0x10] sm:$0xff] %vm510, %v644
      %1004 = vst.msk [vmem:[#allocation2 + $0x18] sm:$0xff] %vm510, %v689
      %1005 = vst.msk [vmem:[#allocation2 + $0x20] sm:$0xff] %vm510, %v734
      %1006 = vst.msk [vmem:[#allocation2 + $0x28] sm:$0xff] %vm510, %v779
      %1007 = vst.msk [vmem:[#allocation2 + $0x30] sm:$0xff] %vm510, %v824
      %1008 = vrot.lane.b32.xlu0 %v807, 4
      %v1009 = vpop.permute.xlu0 %1008
      %1010 = vrot.lane.b32.xlu0 %v812, 8
      %v1011 = vpop.permute.xlu0 %1010
      %v1014 = vunpack.c.l.b16 %v433
      %v1015 = vunpack.c.l.b16 %v434
      %v1016 = vpack.c.b16 %v1015, %v1014
      %1017 = vrot.lane.b32.xlu0 %v1016, 12
      %v1018 = vpop.permute.xlu0 %1017
      %v1020 = vunpack.c.l.b16 %v435
      %v1021 = vpack.c.b16 %v1020, %v1020
      %v1023 = vshrl.u32 %v1016, 16
      %v1025 = vshll.u32 %v1016, 16
      %v1027 = vrot.slane %v1025, 1
      %v1028 = vor.u32 %v1023, %v1027
      %v1030 = vshll.u32 %v1021, 16
      %v1032 = vrot.slane %v1030, 1
      %v1033 = vsel %vm444, %v1028, %v1032
      %1034 = vrot.lane.b32.xlu0 %v1033, 16
      %v1035 = vpop.permute.xlu0 %1034
      %v1036 = vrot.slane %v1016, 1
      %v1037 = vrot.slane %v1021, 1
      %v1038 = vsel %vm459, %v1036, %v1037
      %1039 = vrot.lane.b32.xlu0 %v1038, 20
      %v1040 = vpop.permute.xlu0 %1039
      %v1042 = vsel %vm494, %v790, %v1009
      %v1044 = vsel %vm497, %v1042, %v1011
      %v1046 = vsel %vm500, %v1044, %v1018
      %v1048 = vsel %vm503, %v1046, %v1035
      %v1050 = vsel %vm506, %v1048, %v1040
      %1052 = vst.msk [vmem:[#allocation2 + $0x38] sm:$0xff] %vm510, %v1050
      %v1053 = vld [vmem:[#allocation2] sm:$0xff]
      %v1054 = vld [vmem:[#allocation2 + $0x8] sm:$0xff]
      %v1055 = vld [vmem:[#allocation2 + $0x10] sm:$0xff]
      %v1056 = vld [vmem:[#allocation2 + $0x18] sm:$0xff]
      %v1057 = vld [vmem:[#allocation2 + $0x20] sm:$0xff]
      %v1058 = vld [vmem:[#allocation2 + $0x28] sm:$0xff]
      %v1059 = vld [vmem:[#allocation2 + $0x30] sm:$0xff]
      %v1060 = vld [vmem:[#allocation2 + $0x38] sm:$0xff]
      %s1061 = scalar_lea.vmem %s3, 12
      %v1062 = vld [vmem:[%s1061] sm:$0xf]
      %v1063 = vld [vmem:[%s1061 + $0x4] sm:$0xf]
      %v1064 = vld [vmem:[%s1061 + $0x8] sm:$0xf]
      %v1068 = vunpack.c.l.b16 %v1062
      %v1069 = vunpack.c.l.b16 %v1063
      %v1070 = vunpack.c.l.b16 %v1064
      %v1071 = vpack.c.b16 %v1069, %v1068
      %v1072 = vpack.c.b16 %v1070, %v1070
      %v1075 = vsel %vm510, %v1053, 0
      %v1078 = vsel %vm510, %v1054, 0
      %v1081 = vsel %vm510, %v1055, 0
      %v1084 = vsel %vm510, %v1056, 0
      %v1087 = vsel %vm510, %v1057, 0
      %v1090 = vsel %vm510, %v1058, 0
      %v1093 = vsel %vm510, %v1059, 0
      %v1096 = vsel %vm510, %v1060, 0
      %v1099 = vsel %vm877, %v1072, 0
      %1101 = vmatprep.subr.bf16.mxu0 0
      %1102 = vmatpush1.bf16.msra.mxu0 %v1071
      %1103 = vmatprep.subr.bf16.mxu0 0
      %1104 = vmatpush1.bf16.msra.mxu0 %v1099
      %1105 = vmatprep.subr.bf16.mxu0 0
      %1106 = vmatpush1.bf16.msra.mxu0 0
      %1107 = vmatprep.subr.bf16.mxu0 0
      %1108 = vmatpush1.bf16.msra.mxu0 0
      %1109 = vmatprep.subr.bf16.mxu0 0
      %1110 = vmatpush1.bf16.msra.mxu0 0
      %1111 = vmatprep.subr.bf16.mxu0 0
      %1112 = vmatpush1.bf16.msra.mxu0 0
      %1113 = vmatprep.subr.bf16.mxu0 0
      %1114 = vmatpush1.bf16.msra.mxu0 0
      %1115 = vmatprep.subr.bf16.mxu0 0
      %1116 = vmatpush1.bf16.msra.mxu0 0
      %1117 = vmatprep.subr.bf16.mxu0 0
      %1118 = vmatpush1.bf16.msra.mxu0 0
      %1119 = vmatprep.subr.bf16.mxu0 0
      %1120 = vmatpush1.bf16.msra.mxu0 0
      %1121 = vmatprep.subr.bf16.mxu0 0
      %1122 = vmatpush1.bf16.msra.mxu0 0
      %1123 = vmatprep.subr.bf16.mxu0 0
      %1124 = vmatpush1.bf16.msra.mxu0 0
      %1125 = vmatprep.subr.bf16.mxu0 0
      %1126 = vmatpush1.bf16.msra.mxu0 0
      %1127 = vmatprep.subr.bf16.mxu0 0
      %1128 = vmatpush1.bf16.msra.mxu0 0
      %1129 = vmatprep.subr.bf16.mxu0 0
      %1130 = vmatpush1.bf16.msra.mxu0 0
      %1131 = vmatprep.subr.bf16.mxu0 0
      %1132 = vmatpush1.bf16.msra.mxu0 0
      %1133 = vmatprep.mubr.bf16.mxu0 0
      %1134 = vmatmul.mubr.bf16.gmra.mrb[0].mxu0 %v1075
      %v1135 = vpop.f32.mrb[0].mxu0
      %v1136 = vadd.f32 %v842, %v1135
      %v1137 = vpop.f32.mrb[0].mxu0
      %v1138 = vpop.f32.mrb[0].mxu0
      %v1139 = vadd.f32 %v842, %v1138
      %v1140 = vpop.f32.mrb[0].mxu0
      %1141 = vmatprep.mubr.bf16.mxu0 0
      %1142 = vmatmul.mubr.bf16.gmra.mrb[0].mxu0 %v1078
      %v1143 = vpop.f32.mrb[0].mxu0
      %v1144 = vadd.f32 %v842, %v1143
      %v1145 = vpop.f32.mrb[0].mxu0
      %v1146 = vpop.f32.mrb[0].mxu0
      %v1147 = vadd.f32 %v842, %v1146
      %v1148 = vpop.f32.mrb[0].mxu0
      %1149 = vmatprep.mubr.bf16.mxu0 0
      %1150 = vmatmul.mubr.bf16.gmra.mrb[0].mxu0 %v1081
      %v1151 = vpop.f32.mrb[0].mxu0
      %v1152 = vadd.f32 %v842, %v1151
      %v1153 = vpop.f32.mrb[0].mxu0
      %v1154 = vpop.f32.mrb[0].mxu0
      %v1155 = vadd.f32 %v842, %v1154
      %v1156 = vpop.f32.mrb[0].mxu0
      %1157 = vmatprep.mubr.bf16.mxu0 0
      %1158 = vmatmul.mubr.bf16.gmra.mrb[0].mxu0 %v1084
      %v1159 = vpop.f32.mrb[0].mxu0
      %v1160 = vadd.f32 %v842, %v1159
      %v1161 = vpop.f32.mrb[0].mxu0
      %v1162 = vpop.f32.mrb[0].mxu0
      %v1163 = vadd.f32 %v842, %v1162
      %v1164 = vpop.f32.mrb[0].mxu0
      %1165 = vmatprep.mubr.bf16.mxu0 0
      %1166 = vmatmul.mubr.bf16.gmra.mrb[0].mxu0 %v1087
      %v1167 = vpop.f32.mrb[0].mxu0
      %v1168 = vadd.f32 %v842, %v1167
      %v1169 = vpop.f32.mrb[0].mxu0
      %v1170 = vpop.f32.mrb[0].mxu0
      %v1171 = vadd.f32 %v842, %v1170
      %v1172 = vpop.f32.mrb[0].mxu0
      %1173 = vmatprep.mubr.bf16.mxu0 0
      %1174 = vmatmul.mubr.bf16.gmra.mrb[0].mxu0 %v1090
      %v1175 = vpop.f32.mrb[0].mxu0
      %v1176 = vadd.f32 %v842, %v1175
      %v1177 = vpop.f32.mrb[0].mxu0
      %v1178 = vpop.f32.mrb[0].mxu0
      %v1179 = vadd.f32 %v842, %v1178
      %v1180 = vpop.f32.mrb[0].mxu0
      %1181 = vmatprep.mubr.bf16.mxu0 0
      %1182 = vmatmul.mubr.bf16.gmra.mrb[0].mxu0 %v1093
      %v1183 = vpop.f32.mrb[0].mxu0
      %v1184 = vadd.f32 %v842, %v1183
      %v1185 = vpop.f32.mrb[0].mxu0
      %v1186 = vpop.f32.mrb[0].mxu0
      %v1187 = vadd.f32 %v842, %v1186
      %v1188 = vpop.f32.mrb[0].mxu0
      %1189 = vmatprep.mubr.bf16.mxu0 0
      %1190 = vmatmul.mubr.bf16.gmra.mrb[0].mxu0 %v1096
      %v1191 = vpop.f32.mrb[0].mxu0
      %v1192 = vadd.f32 %v842, %v1191
      %v1193 = vpop.f32.mrb[0].mxu0
      %v1194 = vpop.f32.mrb[0].mxu0
      %v1195 = vadd.f32 %v842, %v1194
      %v1196 = vpop.f32.mrb[0].mxu0
      %1197 = vdwg.mxu0
      %s1198 = scalar_lea.vmem %s395, 16
      %1199 = vst.msk [vmem:[%s1198] sm:$0xff] %vm503, %v1136
      %1200 = vst.msk [vmem:[%s1198 + $0x8] sm:$0xff] %vm503, %v1139
      %s1201 = scalar_lea.vmem %s395, 48
      %1202 = vst.msk [vmem:[%s1201] sm:$0xff] %vm503, %v1144
      %1203 = vst.msk [vmem:[%s1201 + $0x8] sm:$0xff] %vm503, %v1147
      %s1204 = scalar_lea.vmem %s395, 80
      %1205 = vst.msk [vmem:[%s1204] sm:$0xff] %vm503, %v1152
      %1206 = vst.msk [vmem:[%s1204 + $0x8] sm:$0xff] %vm503, %v1155
      %s1207 = scalar_lea.vmem %s395, 112
      %1208 = vst.msk [vmem:[%s1207] sm:$0xff] %vm503, %v1160
      %1209 = vst.msk [vmem:[%s1207 + $0x8] sm:$0xff] %vm503, %v1163
      %s1210 = scalar_lea.vmem %s395, 144
      %1211 = vst.msk [vmem:[%s1210] sm:$0xff] %vm503, %v1168
      %1212 = vst.msk [vmem:[%s1210 + $0x8] sm:$0xff] %vm503, %v1171
      %s1213 = scalar_lea.vmem %s395, 176
      %1214 = vst.msk [vmem:[%s1213] sm:$0xff] %vm503, %v1176
      %1215 = vst.msk [vmem:[%s1213 + $0x8] sm:$0xff] %vm503, %v1179
      %s1216 = scalar_lea.vmem %s395, 208
      %1217 = vst.msk [vmem:[%s1216] sm:$0xff] %vm503, %v1184
      %1218 = vst.msk [vmem:[%s1216 + $0x8] sm:$0xff] %vm503, %v1187
      %s1219 = scalar_lea.vmem %s395, 240
      %1220 = vst.msk [vmem:[%s1219] sm:$0xff] %vm503, %v1192
      %1221 = vst.msk [vmem:[%s1219 + $0x8] sm:$0xff] %vm503, %v1195
      %s1222 = smul.u32 16, %s21
      %p1223 = scmp.lt.s32.totalorder %s20, 1
      %s1224 = scalar_select %p1223, %s20, 1
      %p1225 = scmp.lt.s32.totalorder %s1222, 31
      %s1226 = scalar_select %p1225, %s1222, 31
      %s1227 = smul.addr %s1226, 2
      %s1228 = smul.addr %s1224, 64
      %s1229 = sadd.s32 %s1227, %s1228
      %s1230 = smul.addr %s1229, 8
      %s1231 = scalar_lea.vmem %s5, %s1230
      // Predicated region
      $region41: #{tpu_custom_call.1} parent=39 // pred_check
        %p1232 = pneg %p184
      $region42: #{tpu_custom_call.1} parent=39 // pred_check_branch
        %1234 = sbr.rel (%p1232) target = $region44
      $region43: #{tpu_custom_call.1} parent=39 // pred_region
        %s1235 = smul.u32 16, %s21
      $region44: #{tpu_custom_call.1} parent=39 // pred_fallthru
        _
    $region40: #{tpu_custom_call.1} parent=5 // pred_fallthru
      _
    %p1236 = scmp.le.s32.totalorder 2, %s11
    // Predicated region
    $region45: #{tpu_custom_call.1} parent=5 // pred_check
      %p1237 = pneg %p1236
    $region46: #{tpu_custom_call.1} parent=5 // pred_check_branch
      %1239 = sbr.rel (%p1237) target = $region48
    $region47: #{tpu_custom_call.1} parent=5 // pred_region
      %s1240 = ssub.s32 %s11, 2
      // Predicated region
      $region49: #{tpu_custom_call.1} parent=47 // pred_check
        %p1241 = pneg %p190
      $region50: #{tpu_custom_call.1} parent=47 // pred_check_branch
        %1243 = sbr.rel (%p1241) target = $region52
      $region51: #{tpu_custom_call.1} parent=47 // pred_region
        %s1244 = smul.u32 16, %s23
        %p1245 = scmp.lt.s32.totalorder %s22, 1
        %s1246 = scalar_select %p1245, %s22, 1
        %p1247 = scmp.lt.s32.totalorder %s1244, 31
        %s1248 = scalar_select %p1247, %s1244, 31
        %s1249 = smul.addr %s1248, 2
        %s1250 = smul.addr %s1246, 64
        %s1251 = sadd.s32 %s1249, %s1250
        %s1252 = smul.addr %s1251, 8
        %s1253 = scalar_lea.vmem %s5, %s1252
      $region52: #{tpu_custom_call.1} parent=47 // pred_fallthru
        _
    $region48: #{tpu_custom_call.1} parent=5 // pred_fallthru
      _
  $region6: #{tpu_custom_call.1} parent=0 // loop_footer
    %s15 = sadd.s32 1, %s11
  $region7: #{tpu_custom_call.1} parent=0 // loop_footer_branch
    %10 = sbr.rel target = $region3
  $region8: #{tpu_custom_call.1} parent=0 // loop_exit
    _

</llo_original>
